<compile_context>
chip_gen: v7x
topology: tpu7x:2x2x1
jax: 0.10.0
libtpu: 0.0.40
codegen_flags: <defaults>
</compile_context>

<pallas_src>
import functools

import jax
import jax.numpy as jnp
from jax.experimental import pallas as pl
from jax.experimental.pallas import tpu as pltpu


def _round_up(x, m):
    return ((x + m - 1) // m) * m


def _cdiv(a, b):
    return (a + b - 1) // b


def _dgm_kernel(x_ref, s_ref, u_ref, w_ref, wh_ref, b_ref, out_ref, *, act):
    """One batch tile of the DGM layer.

    x_ref  : (tb, in)      input features (f32, cast to matmul dtype here)
    s_ref  : (tb, n)       previous state (f32)
    u_ref  : (in, 4n)      [Uz|Ug|Ur|Uh]        (matmul dtype, resident)
    w_ref  : (n, 3n)       [Wz|Wg|Wr]           (matmul dtype, resident)
    wh_ref : (n, n)        Wh                   (matmul dtype, resident)
    b_ref  : (1, 4n)       [bz|bg|br|bh]        (f32, resident)
    out_ref: (tb, n)       new state            (f32, aliased with s's buffer)
    """
    n = out_ref.shape[-1]
    mm_dtype = u_ref.dtype
    act_fn = jnp.tanh if act == "tanh" else (lambda v: jnp.maximum(v, 0.0))

    x = x_ref[...].astype(mm_dtype)
    s_f32 = s_ref[...]
    s = s_f32.astype(mm_dtype)

    # Two lane-dense MXU calls for all four gate pre-activations (f32 acc).
    pre = jnp.dot(x, u_ref[...], preferred_element_type=jnp.float32) + b_ref[...]
    pre_s = jnp.dot(s, w_ref[...], preferred_element_type=jnp.float32)

    zgr = pre[:, : 3 * n] + pre_s
    z = act_fn(zgr[:, 0 * n:1 * n])
    g = act_fn(zgr[:, 1 * n:2 * n])
    r = act_fn(zgr[:, 2 * n:3 * n])

    # H = act(x @ Uh + (s * R) @ Wh + bh)   (bh already folded into `pre`)
    sr = (s_f32 * r).astype(mm_dtype)
    h = act_fn(pre[:, 3 * n:4 * n]
               + jnp.dot(sr, wh_ref[...], preferred_element_type=jnp.float32))

    # s_new = (1 - G) * H + Z * s
    out_ref[...] = ((1.0 - g) * h + z * s_f32).astype(out_ref.dtype)


@functools.partial(jax.jit, static_argnames=("block_batch", "activation"))
def dgm_layer_forward(x, s, fused, *, block_batch=512, activation="relu"):
    """Pallas forward pass for DGMLayer.

    x:     (B, input_size)  f32
    s:     (B, output_size) f32
    fused: dict from fuse_dgm_params() -- U (in, 4n_pad), W (n_pad, 3n_pad),
           Wh (n_pad, n_pad), b (1, 4n_pad) where n_pad = round_up(out, 128).
    """
    B, in_size = x.shape
    out_size = s.shape[-1]
    u, w, wh, b = fused["U"], fused["W"], fused["Wh"], fused["b"]
    n_pad = u.shape[1] // 4

    x_in = x.astype(jnp.float32)
    s_in = s.astype(jnp.float32)
    if n_pad != out_size:  # lane-pad the state so gate slices / stores are dense
        s_in = jnp.pad(s_in, ((0, 0), (0, n_pad - out_size)))

    # Batch tile: multiple of 8 sublanes, capped by block_batch, and small
    # enough to give >= 2 grid steps (both TensorCores on v7x get work).
    tb = max(8, min(block_batch, _round_up(B, 8)))
    tb = (tb // 8) * 8
    if B > 8:
        tb = min(tb, _round_up(_cdiv(B, 2), 8))
    grid = (_cdiv(B, tb),)

    # Explicit VMEM budget: resident weights + double-buffered activation tiles.
    mm_bytes = jnp.dtype(u.dtype).itemsize
    weight_bytes = (u.size + w.size + wh.size) * mm_bytes + b.size * 4
    act_bytes = tb * (in_size + 2 * n_pad) * 4  # x tile + s tile + out tile (f32)
    vmem_limit = int(min(112 * 2**20,
                         max(32 * 2**20, 2 * (weight_bytes + 2 * act_bytes))))

    out = pl.pallas_call(
        functools.partial(_dgm_kernel, act=activation),
        out_shape=jax.ShapeDtypeStruct((B, n_pad), jnp.float32),
        grid=grid,
        in_specs=[
            pl.BlockSpec((tb, in_size), lambda i: (i, 0)),        # x   (streams)
            pl.BlockSpec((tb, n_pad), lambda i: (i, 0)),          # s   (streams)
            pl.BlockSpec((in_size, 4 * n_pad), lambda i: (0, 0)),  # U   (resident)
            pl.BlockSpec((n_pad, 3 * n_pad), lambda i: (0, 0)),    # W   (resident)
            pl.BlockSpec((n_pad, n_pad), lambda i: (0, 0)),        # Wh  (resident)
            pl.BlockSpec((1, 4 * n_pad), lambda i: (0, 0)),        # b   (resident)
        ],
        out_specs=pl.BlockSpec((tb, n_pad), lambda i: (i, 0)),
        input_output_aliases={1: 0},  # s buffer is reused in place for s_new
        compiler_params=pltpu.CompilerParams(
            dimension_semantics=("parallel",),
            vmem_limit_bytes=vmem_limit),
    )(x_in, s_in, u, w, wh, b)

    return out[:, :out_size] if n_pad != out_size else out


def fuse_dgm_params(params, matmul_dtype=jnp.bfloat16, lane=128):
    """Fuse the 8 weights / 4 biases into lane-padded slabs (done once).

    Weight columns (and Wh rows/cols) are zero-padded so out_size becomes a
    multiple of `lane`; the padded columns compute exact zeros and are sliced
    off by the wrapper, so results match the un-padded math for real columns.
    """
    in_size, out_size = params["Uz"].shape
    n_pad = _round_up(out_size, lane) if lane else out_size
    dn = n_pad - out_size

    pad_u = lambda m: jnp.pad(m, ((0, 0), (0, dn)))         # (in, out) -> (in, n_pad)
    pad_w = lambda m: jnp.pad(m, ((0, dn), (0, dn)))        # (out, out) -> (n_pad, n_pad)
    pad_b = lambda v: jnp.pad(v, ((0, 0), (0, dn)))         # (1, out) -> (1, n_pad)

    u = jnp.concatenate([pad_u(params["Uz"]), pad_u(params["Ug"]),
                         pad_u(params["Ur"]), pad_u(params["Uh"])],
                        axis=1).astype(matmul_dtype)
    w = jnp.concatenate([pad_w(params["Wz"]), pad_w(params["Wg"]),
                         pad_w(params["Wr"])], axis=1).astype(matmul_dtype)
    wh = pad_w(params["Wh"]).astype(matmul_dtype)
    b = jnp.concatenate([pad_b(params["bz"]), pad_b(params["bg"]),
                         pad_b(params["br"]), pad_b(params["bh"])],
                        axis=1).astype(jnp.float32)
    return {"U": u, "W": w, "Wh": wh, "b": b}


def _xavier_uniform(key, shape, gain):
    fan_in, fan_out = shape
    bound = gain * jnp.sqrt(6.0 / (fan_in + fan_out))
    return jax.random.uniform(key, shape, dtype=jnp.float32,
                              minval=-bound, maxval=bound)


def init_dgm_params(key, input_size, output_size):
    gain = jnp.sqrt(2.0)  # nn.init.calculate_gain('relu')
    keys = jax.random.split(key, 8)
    return {
        "Uz": _xavier_uniform(keys[0], (input_size, output_size), gain),
        "Ug": _xavier_uniform(keys[1], (input_size, output_size), gain),
        "Ur": _xavier_uniform(keys[2], (input_size, output_size), gain),
        "Uh": _xavier_uniform(keys[3], (input_size, output_size), gain),
        "Wz": _xavier_uniform(keys[4], (output_size, output_size), gain),
        "Wg": _xavier_uniform(keys[5], (output_size, output_size), gain),
        "Wr": _xavier_uniform(keys[6], (output_size, output_size), gain),
        "Wh": _xavier_uniform(keys[7], (output_size, output_size), gain),
        "bz": jnp.zeros((1, output_size), jnp.float32),
        "bg": jnp.zeros((1, output_size), jnp.float32),
        "br": jnp.zeros((1, output_size), jnp.float32),
        "bh": jnp.zeros((1, output_size), jnp.float32),
    }


def dgm_layer_reference(x, s, p):
    """Pure-JAX reference mirroring the PyTorch forward (func='relu')."""
    relu = lambda v: jnp.maximum(v, 0.0)
    Z = relu(x @ p["Uz"] + s @ p["Wz"] + p["bz"])
    G = relu(x @ p["Ug"] + s @ p["Wg"] + p["bg"])
    R = relu(x @ p["Ur"] + s @ p["Wr"] + p["br"])
    H = relu(x @ p["Uh"] + (s * R) @ p["Wh"] + p["bh"])
    return (jnp.ones_like(G) - G) * H + Z * s


if __name__ == "__main__":
    input_size = 16
    output_size = 32
    batch = 200  # -> 2 grid steps with a partial tail tile (exercises masking)

    key = jax.random.PRNGKey(0)
    k_param, k_x, k_s = jax.random.split(key, 3)

    params = init_dgm_params(k_param, input_size, output_size)
    fused_bf16 = fuse_dgm_params(params)                               # default bf16 MXU path
    fused_f32 = fuse_dgm_params(params, matmul_dtype=jnp.float32)      # exact-parity path

    x = jax.random.normal(k_x, (batch, input_size), dtype=jnp.float32)
    s = jax.random.normal(k_s, (batch, output_size), dtype=jnp.float32)

    ref = dgm_layer_reference(x, s, params)

    out_f32 = jax.block_until_ready(dgm_layer_forward(x, s, fused_f32))
    assert out_f32.shape == (batch, output_size)
    assert jnp.allclose(out_f32, ref, atol=1e-4, rtol=1e-4), "f32 path mismatch vs reference"

    out_bf16 = jax.block_until_ready(dgm_layer_forward(x, s, fused_bf16))
    assert out_bf16.shape == (batch, output_size)
    max_err = float(jnp.max(jnp.abs(out_bf16 - ref)))
    assert max_err < 0.5, f"bf16 path max abs err too large: {max_err}"

    print("KERNEL_OK")
</pallas_src>

<mosaic_0001>
module attributes {stable_mosaic.version = 11 : i64} {
  func.func @_dgm_kernel(%arg0: i32, %arg1: memref<104x16xf32, #tpu.memory_space<vmem>>, %arg2: memref<104x128xf32, #tpu.memory_space<vmem>>, %arg3: memref<16x512xf32, #tpu.memory_space<vmem>>, %arg4: memref<128x384xf32, #tpu.memory_space<vmem>>, %arg5: memref<128x128xf32, #tpu.memory_space<vmem>>, %arg6: memref<1x512xf32, #tpu.memory_space<vmem>>, %arg7: memref<104x128xf32, #tpu.memory_space<vmem>>) attributes {dimension_semantics = [#tpu.dimension_semantics<parallel>], iteration_bounds = array<i64: 2>, scalar_prefetch = 0 : i64, scratch_operands = 0 : i64, tpu.core_type = #tpu.core_type<tc>, window_params = [{transform_indices = @transform_0, window_bounds = array<i64: 104, 16>}, {transform_indices = @transform_1, window_bounds = array<i64: 104, 128>}, {pipeline_mode = #tpu.pipeline_mode<synchronous>, transform_indices = @transform_2, window_bounds = array<i64: 16, 512>}, {pipeline_mode = #tpu.pipeline_mode<synchronous>, transform_indices = @transform_3, window_bounds = array<i64: 128, 384>}, {pipeline_mode = #tpu.pipeline_mode<synchronous>, transform_indices = @transform_4, window_bounds = array<i64: 128, 128>}, {pipeline_mode = #tpu.pipeline_mode<synchronous>, transform_indices = @transform_5, window_bounds = array<i64: 1, 512>}, {transform_indices = @transform_6, window_bounds = array<i64: 104, 128>}]} {
    %c0 = arith.constant 0 : index
    %c0_0 = arith.constant 0 : index
    %0 = vector.load %arg1[%c0, %c0_0] : memref<104x16xf32, #tpu.memory_space<vmem>>, vector<104x16xf32>
    %c0_1 = arith.constant 0 : index
    %c0_2 = arith.constant 0 : index
    %1 = vector.load %arg2[%c0_1, %c0_2] : memref<104x128xf32, #tpu.memory_space<vmem>>, vector<104x128xf32>
    %c0_3 = arith.constant 0 : index
    %c0_4 = arith.constant 0 : index
    %2 = vector.load %arg3[%c0_3, %c0_4] : memref<16x512xf32, #tpu.memory_space<vmem>>, vector<16x512xf32>
    %cst = arith.constant dense<0.000000e+00> : vector<104x512xf32>
    %3 = tpu.matmul %0, %2, %cst {dimension_numbers = #tpu.dot_dimension_numbers<[1], [0], [0], [1], [0, 0, 1, 1], [], []>} : vector<104x16xf32>, vector<16x512xf32>, vector<104x512xf32> -> vector<104x512xf32>
    %c0_5 = arith.constant 0 : index
    %c0_6 = arith.constant 0 : index
    %4 = vector.load %arg6[%c0_5, %c0_6] : memref<1x512xf32, #tpu.memory_space<vmem>>, vector<1x512xf32>
    %5 = vector.broadcast %4 : vector<1x512xf32> to vector<104x512xf32>
    %6 = arith.addf %3, %5 : vector<104x512xf32>
    %c0_7 = arith.constant 0 : index
    %c0_8 = arith.constant 0 : index
    %7 = vector.load %arg4[%c0_7, %c0_8] : memref<128x384xf32, #tpu.memory_space<vmem>>, vector<128x384xf32>
    %cst_9 = arith.constant dense<0.000000e+00> : vector<104x384xf32>
    %8 = tpu.matmul %1, %7, %cst_9 {dimension_numbers = #tpu.dot_dimension_numbers<[1], [0], [0], [1], [0, 0, 1, 1], [], []>} : vector<104x128xf32>, vector<128x384xf32>, vector<104x384xf32> -> vector<104x384xf32>
    %9 = vector.extract_strided_slice %6 {offsets = [0, 0], sizes = [104, 384], strides = [1, 1]} : vector<104x512xf32> to vector<104x384xf32>
    %10 = arith.addf %9, %8 : vector<104x384xf32>
    %11 = vector.extract_strided_slice %10 {offsets = [0, 0], sizes = [104, 128], strides = [1, 1]} : vector<104x384xf32> to vector<104x128xf32>
    %cst_10 = arith.constant 0.000000e+00 : f32
    %12 = vector.broadcast %cst_10 : f32 to vector<104x128xf32>
    %13 = arith.maximumf %11, %12 : vector<104x128xf32>
    %14 = vector.extract_strided_slice %10 {offsets = [0, 128], sizes = [104, 128], strides = [1, 1]} : vector<104x384xf32> to vector<104x128xf32>
    %cst_11 = arith.constant 0.000000e+00 : f32
    %15 = vector.broadcast %cst_11 : f32 to vector<104x128xf32>
    %16 = arith.maximumf %14, %15 : vector<104x128xf32>
    %17 = vector.extract_strided_slice %10 {offsets = [0, 256], sizes = [104, 128], strides = [1, 1]} : vector<104x384xf32> to vector<104x128xf32>
    %cst_12 = arith.constant 0.000000e+00 : f32
    %18 = vector.broadcast %cst_12 : f32 to vector<104x128xf32>
    %19 = arith.maximumf %17, %18 : vector<104x128xf32>
    %20 = arith.mulf %1, %19 : vector<104x128xf32>
    %21 = vector.extract_strided_slice %6 {offsets = [0, 384], sizes = [104, 128], strides = [1, 1]} : vector<104x512xf32> to vector<104x128xf32>
    %c0_13 = arith.constant 0 : index
    %c0_14 = arith.constant 0 : index
    %22 = vector.load %arg5[%c0_13, %c0_14] : memref<128x128xf32, #tpu.memory_space<vmem>>, vector<128x128xf32>
    %cst_15 = arith.constant dense<0.000000e+00> : vector<104x128xf32>
    %23 = tpu.matmul %20, %22, %cst_15 {dimension_numbers = #tpu.dot_dimension_numbers<[1], [0], [0], [1], [0, 0, 1, 1], [], []>} : vector<104x128xf32>, vector<128x128xf32>, vector<104x128xf32> -> vector<104x128xf32>
    %24 = arith.addf %21, %23 : vector<104x128xf32>
    %cst_16 = arith.constant 0.000000e+00 : f32
    %25 = vector.broadcast %cst_16 : f32 to vector<104x128xf32>
    %26 = arith.maximumf %24, %25 : vector<104x128xf32>
    %cst_17 = arith.constant 1.000000e+00 : f32
    %27 = vector.broadcast %cst_17 : f32 to vector<104x128xf32>
    %28 = arith.subf %27, %16 : vector<104x128xf32>
    %29 = arith.mulf %28, %26 : vector<104x128xf32>
    %30 = arith.mulf %13, %1 : vector<104x128xf32>
    %31 = arith.addf %29, %30 : vector<104x128xf32>
    %c0_18 = arith.constant 0 : index
    %c0_19 = arith.constant 0 : index
    %32 = vector.load %arg7[%c0_18, %c0_19] : memref<104x128xf32, #tpu.memory_space<vmem>>, vector<104x128xf32>
    tpu.vector_store %arg7[%c0_18, %c0_19], %31 {strides = array<i32>} : memref<104x128xf32, #tpu.memory_space<vmem>>, vector<104x128xf32>,
    return
  }
  func.func @transform_0(%arg0: i32) -> (i32, i32) {
    %c0_i32 = arith.constant 0 : i32
    %c0_i32_0 = arith.constant 0 : i32
    return %arg0, %c0_i32 : i32, i32
  }
  func.func @transform_1(%arg0: i32) -> (i32, i32) {
    %c0_i32 = arith.constant 0 : i32
    %c0_i32_0 = arith.constant 0 : i32
    return %arg0, %c0_i32 : i32, i32
  }
  func.func @transform_2(%arg0: i32) -> (i32, i32) {
    %c0_i32 = arith.constant 0 : i32
    %c0_i32_0 = arith.constant 0 : i32
    %c0_i32_1 = arith.constant 0 : i32
    return %c0_i32, %c0_i32_0 : i32, i32
  }
  func.func @transform_3(%arg0: i32) -> (i32, i32) {
    %c0_i32 = arith.constant 0 : i32
    %c0_i32_0 = arith.constant 0 : i32
    %c0_i32_1 = arith.constant 0 : i32
    return %c0_i32, %c0_i32_0 : i32, i32
  }
  func.func @transform_4(%arg0: i32) -> (i32, i32) {
    %c0_i32 = arith.constant 0 : i32
    %c0_i32_0 = arith.constant 0 : i32
    %c0_i32_1 = arith.constant 0 : i32
    return %c0_i32, %c0_i32_0 : i32, i32
  }
  func.func @transform_5(%arg0: i32) -> (i32, i32) {
    %c0_i32 = arith.constant 0 : i32
    %c0_i32_0 = arith.constant 0 : i32
    %c0_i32_1 = arith.constant 0 : i32
    return %c0_i32, %c0_i32_0 : i32, i32
  }
  func.func @transform_6(%arg0: i32) -> (i32, i32) {
    %c0_i32 = arith.constant 0 : i32
    %c0_i32_0 = arith.constant 0 : i32
    return %arg0, %c0_i32 : i32, i32
  }
}

</mosaic_0001>

<llo_original>
// kernel: dgm_layer_forward.1
$region0: #{dgm_layer_forward.1}
  #allocation0 [shape = 'u32[]', space=smem, size = 0x4, offset = 0x4, fixed_abs, tag = 'smem constant byte address 0x4 - core index']
  #allocation1 [shape = 'u32[144,128]{1,0:T(1,128)}', space=vmem, size = 0x12000, scoped, tag = 'internal scratch']
  %s0 = inlined_call_operand.vmem [shape: f32[200,16], index: 0, kind: input, shape index: {}]
  %s1 = inlined_call_operand.vmem [shape: f32[200,128], index: 1, kind: input, shape index: {}, may-alias: {1,6}]
  %s2 = inlined_call_operand.vmem [shape: f32[16,512], index: 2, kind: input, shape index: {}]
  %s3 = inlined_call_operand.vmem [shape: f32[128,384], index: 3, kind: input, shape index: {}]
  %s4 = inlined_call_operand.vmem [shape: f32[128,128], index: 4, kind: input, shape index: {}]
  %s5 = inlined_call_operand.vmem [shape: f32[1,512], index: 5, kind: input, shape index: {}]
  %s6 = inlined_call_operand.vmem [shape: f32[200,128], index: 6, kind: output, shape index: {}, may-alias: {1,6}]
  %s7 = sld [smem:[#allocation0]]
  $region105: #{dgm_layer_forward.1} parent=0
    _
  %s9 = ssub.s32 1, %s7
  %s10 = scalar_select 0, %s9, %s7
  $region1: #{dgm_layer_forward.1} parent=0
    #allocation2 [shape = 'u8[106496]{0}', space=vmem, size = 0x1a000, scoped, tag = 'output window, operand 0']
    loop: start=0, step=1, limit=4
    $region2: #{dgm_layer_forward.1} parent=1 // loop_pre_header
      _
    $region3: #{dgm_layer_forward.1} parent=1 // loop_header
      %s12 = sphi 0, %s16
      %p13 = scmp.ge.s32.totalorder %s12, 4
      %s22 = sphi 0, %s24
      %s25 = sphi 0, %s22
      %s26 = sphi 0, %s25
      %s42 = sphi 0, %s26
      %s48 = sphi 0, %s50
      %s51 = sphi 0, %s48
      %s52 = sphi 0, %s51
      %s68 = sphi 0, %s52
      %s72 = sphi 0, %s72
      %s74 = sphi 0, %s72
      %s75 = sphi 0, %s74
      %s89 = sphi 0, %s75
      %s93 = sphi 0, %s93
      %s95 = sphi 0, %s93
      %s96 = sphi 0, %s95
      %s110 = sphi 0, %s96
      %s114 = sphi 0, %s114
      %s116 = sphi 0, %s114
      %s117 = sphi 0, %s116
      %s131 = sphi 0, %s117
      %s135 = sphi 0, %s135
      %s137 = sphi 0, %s135
      %s138 = sphi 0, %s137
      %s152 = sphi 0, %s138
      %s158 = sphi 0, %s160
      %s161 = sphi 0, %s158
      %s162 = sphi 0, %s161
      %s178 = sphi 0, %s162
    $region4: #{dgm_layer_forward.1} parent=1 // loop_header_branch
      %15 = sbr.rel (%p13) target = $region8
    $region5: #{dgm_layer_forward.1} parent=1 // loop_body
      %s17 = ssub.s32 %s12, 1
      %s18 = ssub.s32 %s12, 2
      %s19 = sadd.s32 %s12, 1
      %s20 = ssub.s32 %s12, %s19
      %p21 = scmp.eq.s32.totalorder %s20, 0
      %s23 = sadd.s32 %s22, 1
      %s24 = scalar_select %p21, %s22, %s23
      %p27 = pneg %p21
      %p28 = scmp.eq.s32.totalorder %s12, 1
      %p29 = por %p27, %p28
      %p30 = scmp.ne.s32.totalorder %s22, %s25
      %p31 = scmp.eq.s32.totalorder %s12, 0
      %p32 = por %p30, %p31
      %p33 = scmp.ne.s32.totalorder %s22, %s25
      %p34 = scmp.eq.s32.totalorder %s17, 1
      %p35 = por %p33, %p34
      %p36 = scmp.ne.s32.totalorder %s25, %s26
      %p37 = scmp.eq.s32.totalorder %s17, 0
      %p38 = por %p36, %p37
      %p39 = scmp.ne.s32.totalorder %s25, %s26
      %p40 = scmp.eq.s32.totalorder %s18, 1
      %p41 = por %p39, %p40
      %p43 = scmp.ne.s32.totalorder %s26, %s42
      %p44 = scmp.eq.s32.totalorder %s18, 0
      %p45 = por %p43, %p44
      %s46 = ssub.s32 %s12, %s19
      %p47 = scmp.eq.s32.totalorder %s46, 0
      %s49 = sadd.s32 %s48, 1
      %s50 = scalar_select %p47, %s48, %s49
      %p53 = pneg %p47
      %p54 = scmp.eq.s32.totalorder %s12, 1
      %p55 = por %p53, %p54
      %p56 = scmp.ne.s32.totalorder %s48, %s51
      %p57 = scmp.eq.s32.totalorder %s12, 0
      %p58 = por %p56, %p57
      %p59 = scmp.ne.s32.totalorder %s48, %s51
      %p60 = scmp.eq.s32.totalorder %s17, 1
      %p61 = por %p59, %p60
      %p62 = scmp.ne.s32.totalorder %s51, %s52
      %p63 = scmp.eq.s32.totalorder %s17, 0
      %p64 = por %p62, %p63
      %p65 = scmp.ne.s32.totalorder %s51, %s52
      %p66 = scmp.eq.s32.totalorder %s18, 1
      %p67 = por %p65, %p66
      %p69 = scmp.ne.s32.totalorder %s52, %s68
      %p70 = scmp.eq.s32.totalorder %s18, 0
      %p71 = por %p69, %p70
      %s73 = sadd.s32 %s72, 1
      %p76 = scmp.eq.s32.totalorder %s12, 1
      %p77 = scmp.ne.s32.totalorder %s72, %s74
      %p78 = scmp.eq.s32.totalorder %s12, 0
      %p79 = por %p77, %p78
      %p80 = scmp.ne.s32.totalorder %s72, %s74
      %p81 = scmp.eq.s32.totalorder %s17, 1
      %p82 = por %p80, %p81
      %p83 = scmp.ne.s32.totalorder %s74, %s75
      %p84 = scmp.eq.s32.totalorder %s17, 0
      %p85 = por %p83, %p84
      %p86 = scmp.ne.s32.totalorder %s74, %s75
      %p87 = scmp.eq.s32.totalorder %s18, 1
      %p88 = por %p86, %p87
      %p90 = scmp.ne.s32.totalorder %s75, %s89
      %p91 = scmp.eq.s32.totalorder %s18, 0
      %p92 = por %p90, %p91
      %s94 = sadd.s32 %s93, 1
      %p97 = scmp.eq.s32.totalorder %s12, 1
      %p98 = scmp.ne.s32.totalorder %s93, %s95
      %p99 = scmp.eq.s32.totalorder %s12, 0
      %p100 = por %p98, %p99
      %p101 = scmp.ne.s32.totalorder %s93, %s95
      %p102 = scmp.eq.s32.totalorder %s17, 1
      %p103 = por %p101, %p102
      %p104 = scmp.ne.s32.totalorder %s95, %s96
      %p105 = scmp.eq.s32.totalorder %s17, 0
      %p106 = por %p104, %p105
      %p107 = scmp.ne.s32.totalorder %s95, %s96
      %p108 = scmp.eq.s32.totalorder %s18, 1
      %p109 = por %p107, %p108
      %p111 = scmp.ne.s32.totalorder %s96, %s110
      %p112 = scmp.eq.s32.totalorder %s18, 0
      %p113 = por %p111, %p112
      %s115 = sadd.s32 %s114, 1
      %p118 = scmp.eq.s32.totalorder %s12, 1
      %p119 = scmp.ne.s32.totalorder %s114, %s116
      %p120 = scmp.eq.s32.totalorder %s12, 0
      %p121 = por %p119, %p120
      %p122 = scmp.ne.s32.totalorder %s114, %s116
      %p123 = scmp.eq.s32.totalorder %s17, 1
      %p124 = por %p122, %p123
      %p125 = scmp.ne.s32.totalorder %s116, %s117
      %p126 = scmp.eq.s32.totalorder %s17, 0
      %p127 = por %p125, %p126
      %p128 = scmp.ne.s32.totalorder %s116, %s117
      %p129 = scmp.eq.s32.totalorder %s18, 1
      %p130 = por %p128, %p129
      %p132 = scmp.ne.s32.totalorder %s117, %s131
      %p133 = scmp.eq.s32.totalorder %s18, 0
      %p134 = por %p132, %p133
      %s136 = sadd.s32 %s135, 1
      %p139 = scmp.eq.s32.totalorder %s12, 1
      %p140 = scmp.ne.s32.totalorder %s135, %s137
      %p141 = scmp.eq.s32.totalorder %s12, 0
      %p142 = por %p140, %p141
      %p143 = scmp.ne.s32.totalorder %s135, %s137
      %p144 = scmp.eq.s32.totalorder %s17, 1
      %p145 = por %p143, %p144
      %p146 = scmp.ne.s32.totalorder %s137, %s138
      %p147 = scmp.eq.s32.totalorder %s17, 0
      %p148 = por %p146, %p147
      %p149 = scmp.ne.s32.totalorder %s137, %s138
      %p150 = scmp.eq.s32.totalorder %s18, 1
      %p151 = por %p149, %p150
      %p153 = scmp.ne.s32.totalorder %s138, %s152
      %p154 = scmp.eq.s32.totalorder %s18, 0
      %p155 = por %p153, %p154
      %s156 = ssub.s32 %s12, %s19
      %p157 = scmp.eq.s32.totalorder %s156, 0
      %s159 = sadd.s32 %s158, 1
      %s160 = scalar_select %p157, %s158, %s159
      %p163 = pneg %p157
      %p164 = scmp.eq.s32.totalorder %s12, 1
      %p165 = por %p163, %p164
      %p166 = scmp.ne.s32.totalorder %s158, %s161
      %p167 = scmp.eq.s32.totalorder %s12, 0
      %p168 = por %p166, %p167
      %p169 = scmp.ne.s32.totalorder %s158, %s161
      %p170 = scmp.eq.s32.totalorder %s17, 1
      %p171 = por %p169, %p170
      %p172 = scmp.ne.s32.totalorder %s161, %s162
      %p173 = scmp.eq.s32.totalorder %s17, 0
      %p174 = por %p172, %p173
      %p175 = scmp.ne.s32.totalorder %s161, %s162
      %p176 = scmp.eq.s32.totalorder %s18, 1
      %p177 = por %p175, %p176
      %p179 = scmp.ne.s32.totalorder %s162, %s178
      %p180 = scmp.eq.s32.totalorder %s18, 0
      %p181 = por %p179, %p180
      %p182 = scmp.le.s32.totalorder 1, %s12
      %p183 = scmp.lt.s32.totalorder %s12, 3
      %p184 = pnand %p182, %p183
      %p185 = pneg %p184
      // Predicated region
      $region9: #{dgm_layer_forward.1} parent=5 // pred_check
        _
      $region10: #{dgm_layer_forward.1} parent=5 // pred_check_branch
        %187 = sbr.rel (%p184) target = $region12
      $region11: #{dgm_layer_forward.1} parent=5 // pred_region
        %s188 = ssub.s32 %s12, 1
        // Predicated region
        $region13: #{dgm_layer_forward.1} parent=11 // pred_check
          %p189 = pneg %p85
        $region14: #{dgm_layer_forward.1} parent=11 // pred_check_branch
          %191 = sbr.rel (%p189) target = $region16
        $region15: #{dgm_layer_forward.1} parent=11 // pred_region
          _
        $region16: #{dgm_layer_forward.1} parent=11 // pred_fallthru
          _
        // Predicated region
        $region17: #{dgm_layer_forward.1} parent=11 // pred_check
          %p192 = pneg %p106
        $region18: #{dgm_layer_forward.1} parent=11 // pred_check_branch
          %194 = sbr.rel (%p192) target = $region20
        $region19: #{dgm_layer_forward.1} parent=11 // pred_region
          _
        $region20: #{dgm_layer_forward.1} parent=11 // pred_fallthru
          _
        // Predicated region
        $region21: #{dgm_layer_forward.1} parent=11 // pred_check
          %p195 = pneg %p127
        $region22: #{dgm_layer_forward.1} parent=11 // pred_check_branch
          %197 = sbr.rel (%p195) target = $region24
        $region23: #{dgm_layer_forward.1} parent=11 // pred_region
          _
        $region24: #{dgm_layer_forward.1} parent=11 // pred_fallthru
          _
        // Predicated region
        $region25: #{dgm_layer_forward.1} parent=11 // pred_check
          %p198 = pneg %p148
        $region26: #{dgm_layer_forward.1} parent=11 // pred_check_branch
          %200 = sbr.rel (%p198) target = $region28
        $region27: #{dgm_layer_forward.1} parent=11 // pred_region
          _
        $region28: #{dgm_layer_forward.1} parent=11 // pred_fallthru
          _
      $region12: #{dgm_layer_forward.1} parent=5 // pred_fallthru
        _
      %p201 = scmp.lt.s32.totalorder %s12, 2
      // Predicated region
      $region29: #{dgm_layer_forward.1} parent=5 // pred_check
        %p202 = pneg %p201
      $region30: #{dgm_layer_forward.1} parent=5 // pred_check_branch
        %204 = sbr.rel (%p202) target = $region32
      $region31: #{dgm_layer_forward.1} parent=5 // pred_region
        // Predicated region
        $region33: #{dgm_layer_forward.1} parent=31 // pred_check
          %p205 = pneg %p32
        $region34: #{dgm_layer_forward.1} parent=31 // pred_check_branch
          %207 = sbr.rel (%p205) target = $region36
        $region35: #{dgm_layer_forward.1} parent=31 // pred_region
          %s208 = smul.u32 13, %s12
          %s209 = ssub.s32 25, %s208
          %p210 = scmp.lt.s32.totalorder %s209, 13
          %s211 = scalar_select %p210, %s209, 13
          %s212 = smul.u32 128, %s211
          %p213 = scmp.lt.s32.totalorder %s208, 24
          %s214 = scalar_select %p213, %s208, 24
          %s215 = smul.addr %s214, 8
          %s216 = scalar_lea.vmem %s0, %s215
          %s217 = smul.u32 13, %s12
          %s218 = ssub.s32 25, %s217
          %p219 = scmp.lt.s32.totalorder %s218, 13
          %s220 = scalar_select %p219, %s218, 13
          %s221 = smul.u32 128, %s220
        $region36: #{dgm_layer_forward.1} parent=31 // pred_fallthru
          _
        // Predicated region
        $region37: #{dgm_layer_forward.1} parent=31 // pred_check
          %p222 = pneg %p58
        $region38: #{dgm_layer_forward.1} parent=31 // pred_check_branch
          %224 = sbr.rel (%p222) target = $region40
        $region39: #{dgm_layer_forward.1} parent=31 // pred_region
          %s225 = smul.u32 13, %s12
          %s226 = ssub.s32 25, %s225
          %p227 = scmp.lt.s32.totalorder %s226, 13
          %s228 = scalar_select %p227, %s226, 13
          %s229 = smul.u32 128, %s228
          %p230 = scmp.lt.s32.totalorder %s225, 24
          %s231 = scalar_select %p230, %s225, 24
          %s232 = smul.addr %s231, 8
          %s233 = scalar_lea.vmem %s1, %s232
          %s234 = smul.u32 13, %s12
          %s235 = ssub.s32 25, %s234
          %p236 = scmp.lt.s32.totalorder %s235, 13
          %s237 = scalar_select %p236, %s235, 13
          %s238 = smul.u32 128, %s237
        $region40: #{dgm_layer_forward.1} parent=31 // pred_fallthru
          _
      $region32: #{dgm_layer_forward.1} parent=5 // pred_fallthru
        _
      %p239 = scmp.le.s32.totalorder 1, %s12
      %p240 = scmp.lt.s32.totalorder %s12, 3
      %p241 = pnand %p239, %p240
      %p242 = pneg %p241
      // Predicated region
      $region41: #{dgm_layer_forward.1} parent=5 // pred_check
        _
      $region42: #{dgm_layer_forward.1} parent=5 // pred_check_branch
        %244 = sbr.rel (%p241) target = $region44
      $region43: #{dgm_layer_forward.1} parent=5 // pred_region
        %s245 = ssub.s32 %s12, 1
        %s246 = smul.u32 13, %s17
        %s247 = ssub.s32 25, %s246
        %p248 = scmp.lt.s32.totalorder %s247, 13
        %s249 = scalar_select %p248, %s247, 13
        %s250 = smul.u32 128, %s249
        %p251 = scmp.lt.s32.totalorder %s246, 24
        %s252 = scalar_select %p251, %s246, 24
        %s253 = smul.addr %s252, 8
        %s254 = scalar_lea.vmem %s0, %s253
        %p255 = pneg %p38
        %p256 = pneg %p35
        %s257 = smul.u32 13, %s17
        %s258 = ssub.s32 25, %s257
        %p259 = scmp.lt.s32.totalorder %s258, 13
        %s260 = scalar_select %p259, %s258, 13
        %s261 = smul.u32 128, %s260
        %p262 = scmp.lt.s32.totalorder %s257, 24
        %s263 = scalar_select %p262, %s257, 24
        %s264 = smul.addr %s263, 8
        %s265 = scalar_lea.vmem %s1, %s264
        %p266 = pneg %p64
        %p267 = pneg %p61
        %p268 = pneg %p85
        %p269 = pneg %p82
        %p270 = pneg %p106
        %p271 = pneg %p103
        %p272 = pneg %p127
        %p273 = pneg %p124
        %p274 = pneg %p148
        %p275 = pneg %p145
        %p276 = pneg %p174
        %p277 = pneg %p171
        %s278 = sand.u32 %s161, 1
        %s279 = sand.u32 %s161, 1
        %s280 = smul.addr %s279, 104
        %s281 = scalar_lea.vmem [#allocation2], %s280
        %s282 = smul.u32 13, %s17
        %s283 = ssub.s32 25, %s282
        %p284 = scmp.lt.s32.totalorder %s283, 13
        %s285 = scalar_select %p284, %s283, 13
        %s286 = smul.u32 128, %s285
        %p287 = scmp.lt.s32.totalorder %s282, 24
        %s288 = scalar_select %p287, %s282, 24
        %s289 = smul.addr %s288, 8
        %s290 = scalar_lea.vmem %s0, %s289
        %s291 = smul.u32 13, %s17
        %s292 = ssub.s32 25, %s291
        %p293 = scmp.lt.s32.totalorder %s292, 13
        %s294 = scalar_select %p293, %s292, 13
        %s295 = smul.u32 128, %s294
        %s296 = smul.u32 13, %s17
        %s297 = ssub.s32 25, %s296
        %p298 = scmp.lt.s32.totalorder %s297, 13
        %s299 = scalar_select %p298, %s297, 13
        %s300 = smul.u32 128, %s299
        %p301 = scmp.lt.s32.totalorder %s296, 24
        %s302 = scalar_select %p301, %s296, 24
        %s303 = smul.addr %s302, 8
        %s304 = scalar_lea.vmem %s1, %s303
        %s305 = smul.u32 13, %s17
        %s306 = ssub.s32 25, %s305
        %p307 = scmp.lt.s32.totalorder %s306, 13
        %s308 = scalar_select %p307, %s306, 13
        %s309 = smul.u32 128, %s308
        %s310 = smul.u32 13, %s17
        %s311 = ssub.s32 25, %s310
        %p312 = scmp.lt.s32.totalorder %s311, 13
        %s313 = scalar_select %p312, %s311, 13
        %s314 = smul.u32 128, %s313
        %v315 = vld [vmem:[%s290] sm:$0xff]
        %v316 = vld [vmem:[%s290 + $0x8] sm:$0xff]
        %v317 = vld [vmem:[%s290 + $0x10] sm:$0xff]
        %v318 = vld [vmem:[%s290 + $0x18] sm:$0xff]
        %v319 = vld [vmem:[%s290 + $0x20] sm:$0xff]
        %v320 = vld [vmem:[%s290 + $0x28] sm:$0xff]
        %v321 = vld [vmem:[%s290 + $0x30] sm:$0xff]
        %v322 = vld [vmem:[%s290 + $0x38] sm:$0xff]
        %v323 = vld [vmem:[%s290 + $0x40] sm:$0xff]
        %v324 = vld [vmem:[%s290 + $0x48] sm:$0xff]
        %v325 = vld [vmem:[%s290 + $0x50] sm:$0xff]
        %v326 = vld [vmem:[%s290 + $0x58] sm:$0xff]
        %v327 = vld [vmem:[%s290 + $0x60] sm:$0xff]
        %v328 = vld [vmem:[%s304] sm:$0xff]
        %v329 = vld [vmem:[%s304 + $0x8] sm:$0xff]
        %v330 = vld [vmem:[%s304 + $0x10] sm:$0xff]
        %v331 = vld [vmem:[%s304 + $0x18] sm:$0xff]
        %v332 = vld [vmem:[%s304 + $0x20] sm:$0xff]
        %v333 = vld [vmem:[%s304 + $0x28] sm:$0xff]
        %v334 = vld [vmem:[%s304 + $0x30] sm:$0xff]
        %v335 = vld [vmem:[%s304 + $0x38] sm:$0xff]
        %v336 = vld [vmem:[%s304 + $0x40] sm:$0xff]
        %v337 = vld [vmem:[%s304 + $0x48] sm:$0xff]
        %v338 = vld [vmem:[%s304 + $0x50] sm:$0xff]
        %v339 = vld [vmem:[%s304 + $0x58] sm:$0xff]
        %v340 = vld [vmem:[%s304 + $0x60] sm:$0xff]
        %v341 = vld [vmem:[%s2] sm:$0xff]
        %v342 = vld [vmem:[%s2 + $0x8] sm:$0xff]
        %v343 = vld [vmem:[%s2 + $0x10] sm:$0xff]
        %v344 = vld [vmem:[%s2 + $0x18] sm:$0xff]
        %v345 = vld [vmem:[%s2 + $0x20] sm:$0xff]
        %v346 = vld [vmem:[%s2 + $0x28] sm:$0xff]
        %v347 = vld [vmem:[%s2 + $0x30] sm:$0xff]
        %v348 = vld [vmem:[%s2 + $0x38] sm:$0xff]
        %v349 = vld [vmem:[%s5] sm:$0xf]
        %v351 = vlaneseq
        %v352 = vshrl.u32 %v351, 7
        %v353 = vsub.s32 0, %v352
        %v354 = vrot.slane %v349, %v353
        %v355 = vlaneseq
        %v356 = vshrl.u32 %v355, 7
        %v357 = vsub.s32 1, %v356
        %v358 = vrot.slane %v349, %v357
        %v359 = vlaneseq
        %v360 = vshrl.u32 %v359, 7
        %v361 = vsub.s32 2, %v360
        %v362 = vrot.slane %v349, %v361
        %v363 = vlaneseq
        %v364 = vshrl.u32 %v363, 7
        %v365 = vsub.s32 3, %v364
        %v366 = vrot.slane %v349, %v365
        %vm371 = vcmask 130048
        %v373 = vsel %vm371, %v315, 0
        %v376 = vsel %vm371, %v316, 0
        %v379 = vsel %vm371, %v317, 0
        %v382 = vsel %vm371, %v318, 0
        %v385 = vsel %vm371, %v319, 0
        %v388 = vsel %vm371, %v320, 0
        %v391 = vsel %vm371, %v321, 0
        %v394 = vsel %vm371, %v322, 0
        %v397 = vsel %vm371, %v323, 0
        %v400 = vsel %vm371, %v324, 0
        %v403 = vsel %vm371, %v325, 0
        %v406 = vsel %vm371, %v326, 0
        %v409 = vsel %vm371, %v327, 0
        %411 = vmatprep.subr.mxu0 %v342
        %412 = vmatpush1.msra.mxu0 %v341
        %413 = vmatprep.subr.mxu0 %v346
        %414 = vmatpush1.msra.mxu0 %v345
        %415 = vmatprep.subr.mxu0 0.0
        %416 = vmatpush1.msra.mxu0 0.0
        %417 = vmatprep.subr.mxu0 0.0
        %418 = vmatpush1.msra.mxu0 0.0
        %419 = vmatprep.subr.mxu0 0.0
        %420 = vmatpush1.msra.mxu0 0.0
        %421 = vmatprep.subr.mxu0 0.0
        %422 = vmatpush1.msra.mxu0 0.0
        %423 = vmatprep.subr.mxu0 0.0
        %424 = vmatpush1.msra.mxu0 0.0
        %425 = vmatprep.subr.mxu0 0.0
        %426 = vmatpush1.msra.mxu0 0.0
        %427 = vmatprep.subr.mxu0 0.0
        %428 = vmatpush1.msra.mxu0 0.0
        %429 = vmatprep.subr.mxu0 0.0
        %430 = vmatpush1.msra.mxu0 0.0
        %431 = vmatprep.subr.mxu0 0.0
        %432 = vmatpush1.msra.mxu0 0.0
        %433 = vmatprep.subr.mxu0 0.0
        %434 = vmatpush1.msra.mxu0 0.0
        %435 = vmatprep.subr.mxu0 0.0
        %436 = vmatpush1.msra.mxu0 0.0
        %437 = vmatprep.subr.mxu0 0.0
        %438 = vmatpush1.msra.mxu0 0.0
        %439 = vmatprep.subr.mxu0 0.0
        %440 = vmatpush1.msra.mxu0 0.0
        %441 = vmatprep.subr.mxu0 0.0
        %442 = vmatpush1.msra.mxu0 0.0
        %443 = vmatprep.subr.mxu0 0.0
        %444 = vmatpush1.msra.mxu0 0.0
        %445 = vmatprep.subr.mxu0 0.0
        %446 = vmatpush1.msra.mxu0 0.0
        %447 = vmatprep.subr.mxu0 0.0
        %448 = vmatpush1.msra.mxu0 0.0
        %449 = vmatprep.subr.mxu0 0.0
        %450 = vmatpush1.msra.mxu0 0.0
        %451 = vmatprep.subr.mxu0 0.0
        %452 = vmatpush1.msra.mxu0 0.0
        %453 = vmatprep.subr.mxu0 0.0
        %454 = vmatpush1.msra.mxu0 0.0
        %455 = vmatprep.subr.mxu0 0.0
        %456 = vmatpush1.msra.mxu0 0.0
        %457 = vmatprep.subr.mxu0 0.0
        %458 = vmatpush1.msra.mxu0 0.0
        %459 = vmatprep.subr.mxu0 0.0
        %460 = vmatpush1.msra.mxu0 0.0
        %461 = vmatprep.subr.mxu0 0.0
        %462 = vmatpush1.msra.mxu0 0.0
        %463 = vmatprep.subr.mxu0 0.0
        %464 = vmatpush1.msra.mxu0 0.0
        %465 = vmatprep.subr.mxu0 0.0
        %466 = vmatpush1.msra.mxu0 0.0
        %467 = vmatprep.subr.mxu0 0.0
        %468 = vmatpush1.msra.mxu0 0.0
        %469 = vmatprep.subr.mxu0 0.0
        %470 = vmatpush1.msra.mxu0 0.0
        %471 = vmatprep.subr.mxu0 0.0
        %472 = vmatpush1.msra.mxu0 0.0
        %473 = vmatprep.subr.mxu0 0.0
        %474 = vmatpush1.msra.mxu0 0.0
        %475 = vmatprep.mubr.f32.mxu0 0.0
        %476 = vmatmul.mubr.f32.gmra.mrb[0].mxu0 %v373
        %v477 = vpop.f32.mrb[0].mxu0
        %v478 = vadd.f32 %v354, %v477
        %v479 = vpop.f32.mrb[0].mxu0
        %v480 = vadd.f32 %v358, %v479
        %481 = vmatprep.mubr.f32.mxu0 0.0
        %482 = vmatmul.mubr.f32.gmra.mrb[0].mxu0 %v376
        %v483 = vpop.f32.mrb[0].mxu0
        %v484 = vadd.f32 %v354, %v483
        %v485 = vpop.f32.mrb[0].mxu0
        %v486 = vadd.f32 %v358, %v485
        %487 = vmatprep.mubr.f32.mxu0 0.0
        %488 = vmatmul.mubr.f32.gmra.mrb[0].mxu0 %v379
        %v489 = vpop.f32.mrb[0].mxu0
        %v490 = vadd.f32 %v354, %v489
        %v491 = vpop.f32.mrb[0].mxu0
        %v492 = vadd.f32 %v358, %v491
        %493 = vmatprep.mubr.f32.mxu0 0.0
        %494 = vmatmul.mubr.f32.gmra.mrb[0].mxu0 %v382
        %v495 = vpop.f32.mrb[0].mxu0
        %v496 = vadd.f32 %v354, %v495
        %v497 = vpop.f32.mrb[0].mxu0
        %v498 = vadd.f32 %v358, %v497
        %499 = vmatprep.mubr.f32.mxu0 0.0
        %500 = vmatmul.mubr.f32.gmra.mrb[0].mxu0 %v385
        %v501 = vpop.f32.mrb[0].mxu0
        %v502 = vadd.f32 %v354, %v501
        %v503 = vpop.f32.mrb[0].mxu0
        %v504 = vadd.f32 %v358, %v503
        %505 = vmatprep.mubr.f32.mxu0 0.0
        %506 = vmatmul.mubr.f32.gmra.mrb[0].mxu0 %v388
        %v507 = vpop.f32.mrb[0].mxu0
        %v508 = vadd.f32 %v354, %v507
        %v509 = vpop.f32.mrb[0].mxu0
        %v510 = vadd.f32 %v358, %v509
        %511 = vmatprep.mubr.f32.mxu0 0.0
        %512 = vmatmul.mubr.f32.gmra.mrb[0].mxu0 %v391
        %v513 = vpop.f32.mrb[0].mxu0
        %v514 = vadd.f32 %v354, %v513
        %v515 = vpop.f32.mrb[0].mxu0
        %v516 = vadd.f32 %v358, %v515
        %517 = vmatprep.mubr.f32.mxu0 0.0
        %518 = vmatmul.mubr.f32.gmra.mrb[0].mxu0 %v394
        %v519 = vpop.f32.mrb[0].mxu0
        %v520 = vadd.f32 %v354, %v519
        %v521 = vpop.f32.mrb[0].mxu0
        %v522 = vadd.f32 %v358, %v521
        %523 = vmatprep.mubr.f32.mxu0 0.0
        %524 = vmatmul.mubr.f32.gmra.mrb[0].mxu0 %v397
        %v525 = vpop.f32.mrb[0].mxu0
        %v526 = vadd.f32 %v354, %v525
        %v527 = vpop.f32.mrb[0].mxu0
        %v528 = vadd.f32 %v358, %v527
        %529 = vmatprep.mubr.f32.mxu0 0.0
        %530 = vmatmul.mubr.f32.gmra.mrb[0].mxu0 %v400
        %v531 = vpop.f32.mrb[0].mxu0
        %v532 = vadd.f32 %v354, %v531
        %v533 = vpop.f32.mrb[0].mxu0
        %v534 = vadd.f32 %v358, %v533
        %535 = vmatprep.mubr.f32.mxu0 0.0
        %536 = vmatmul.mubr.f32.gmra.mrb[0].mxu0 %v403
        %v537 = vpop.f32.mrb[0].mxu0
        %v538 = vadd.f32 %v354, %v537
        %v539 = vpop.f32.mrb[0].mxu0
        %v540 = vadd.f32 %v358, %v539
        %541 = vmatprep.mubr.f32.mxu0 0.0
        %542 = vmatmul.mubr.f32.gmra.mrb[0].mxu0 %v406
        %v543 = vpop.f32.mrb[0].mxu0
        %v544 = vadd.f32 %v354, %v543
        %v545 = vpop.f32.mrb[0].mxu0
        %v546 = vadd.f32 %v358, %v545
        %547 = vmatprep.mubr.f32.mxu0 0.0
        %548 = vmatmul.mubr.f32.gmra.mrb[0].mxu0 %v409
        %v549 = vpop.f32.mrb[0].mxu0
        %v550 = vadd.f32 %v354, %v549
        %v551 = vpop.f32.mrb[0].mxu0
        %v552 = vadd.f32 %v358, %v551
        %553 = vdwg.mxu0
        %554 = vmatprep.subr.mxu0 %v344
        %555 = vmatpush1.msra.mxu0 %v343
        %556 = vmatprep.subr.mxu0 %v348
        %557 = vmatpush1.msra.mxu0 %v347
        %558 = vmatprep.subr.mxu0 0.0
        %559 = vmatpush1.msra.mxu0 0.0
        %560 = vmatprep.subr.mxu0 0.0
        %561 = vmatpush1.msra.mxu0 0.0
        %562 = vmatprep.subr.mxu0 0.0
        %563 = vmatpush1.msra.mxu0 0.0
        %564 = vmatprep.subr.mxu0 0.0
        %565 = vmatpush1.msra.mxu0 0.0
        %566 = vmatprep.subr.mxu0 0.0
        %567 = vmatpush1.msra.mxu0 0.0
        %568 = vmatprep.subr.mxu0 0.0
        %569 = vmatpush1.msra.mxu0 0.0
        %570 = vmatprep.subr.mxu0 0.0
        %571 = vmatpush1.msra.mxu0 0.0
        %572 = vmatprep.subr.mxu0 0.0
        %573 = vmatpush1.msra.mxu0 0.0
        %574 = vmatprep.subr.mxu0 0.0
        %575 = vmatpush1.msra.mxu0 0.0
        %576 = vmatprep.subr.mxu0 0.0
        %577 = vmatpush1.msra.mxu0 0.0
        %578 = vmatprep.subr.mxu0 0.0
        %579 = vmatpush1.msra.mxu0 0.0
        %580 = vmatprep.subr.mxu0 0.0
        %581 = vmatpush1.msra.mxu0 0.0
        %582 = vmatprep.subr.mxu0 0.0
        %583 = vmatpush1.msra.mxu0 0.0
        %584 = vmatprep.subr.mxu0 0.0
        %585 = vmatpush1.msra.mxu0 0.0
        %586 = vmatprep.subr.mxu0 0.0
        %587 = vmatpush1.msra.mxu0 0.0
        %588 = vmatprep.subr.mxu0 0.0
        %589 = vmatpush1.msra.mxu0 0.0
        %590 = vmatprep.subr.mxu0 0.0
        %591 = vmatpush1.msra.mxu0 0.0
        %592 = vmatprep.subr.mxu0 0.0
        %593 = vmatpush1.msra.mxu0 0.0
        %594 = vmatprep.subr.mxu0 0.0
        %595 = vmatpush1.msra.mxu0 0.0
        %596 = vmatprep.subr.mxu0 0.0
        %597 = vmatpush1.msra.mxu0 0.0
        %598 = vmatprep.subr.mxu0 0.0
        %599 = vmatpush1.msra.mxu0 0.0
        %600 = vmatprep.subr.mxu0 0.0
        %601 = vmatpush1.msra.mxu0 0.0
        %602 = vmatprep.subr.mxu0 0.0
        %603 = vmatpush1.msra.mxu0 0.0
        %604 = vmatprep.subr.mxu0 0.0
        %605 = vmatpush1.msra.mxu0 0.0
        %606 = vmatprep.subr.mxu0 0.0
        %607 = vmatpush1.msra.mxu0 0.0
        %608 = vmatprep.subr.mxu0 0.0
        %609 = vmatpush1.msra.mxu0 0.0
        %610 = vmatprep.subr.mxu0 0.0
        %611 = vmatpush1.msra.mxu0 0.0
        %612 = vmatprep.subr.mxu0 0.0
        %613 = vmatpush1.msra.mxu0 0.0
        %614 = vmatprep.subr.mxu0 0.0
        %615 = vmatpush1.msra.mxu0 0.0
        %616 = vmatprep.subr.mxu0 0.0
        %617 = vmatpush1.msra.mxu0 0.0
        %618 = vmatprep.mubr.f32.mxu0 0.0
        %619 = vmatmul.mubr.f32.gmra.mrb[0].mxu0 %v373
        %v620 = vpop.f32.mrb[0].mxu0
        %v621 = vadd.f32 %v362, %v620
        %v622 = vpop.f32.mrb[0].mxu0
        %v623 = vadd.f32 %v366, %v622
        %624 = vmatprep.mubr.f32.mxu0 0.0
        %625 = vmatmul.mubr.f32.gmra.mrb[0].mxu0 %v376
        %v626 = vpop.f32.mrb[0].mxu0
        %v627 = vadd.f32 %v362, %v626
        %v628 = vpop.f32.mrb[0].mxu0
        %v629 = vadd.f32 %v366, %v628
        %630 = vmatprep.mubr.f32.mxu0 0.0
        %631 = vmatmul.mubr.f32.gmra.mrb[0].mxu0 %v379
        %v632 = vpop.f32.mrb[0].mxu0
        %v633 = vadd.f32 %v362, %v632
        %v634 = vpop.f32.mrb[0].mxu0
        %v635 = vadd.f32 %v366, %v634
        %636 = vmatprep.mubr.f32.mxu0 0.0
        %637 = vmatmul.mubr.f32.gmra.mrb[0].mxu0 %v382
        %v638 = vpop.f32.mrb[0].mxu0
        %v639 = vadd.f32 %v362, %v638
        %v640 = vpop.f32.mrb[0].mxu0
        %v641 = vadd.f32 %v366, %v640
        %642 = vmatprep.mubr.f32.mxu0 0.0
        %643 = vmatmul.mubr.f32.gmra.mrb[0].mxu0 %v385
        %v644 = vpop.f32.mrb[0].mxu0
        %v645 = vadd.f32 %v362, %v644
        %v646 = vpop.f32.mrb[0].mxu0
        %v647 = vadd.f32 %v366, %v646
        %648 = vmatprep.mubr.f32.mxu0 0.0
        %649 = vmatmul.mubr.f32.gmra.mrb[0].mxu0 %v388
        %v650 = vpop.f32.mrb[0].mxu0
        %v651 = vadd.f32 %v362, %v650
        %v652 = vpop.f32.mrb[0].mxu0
        %v653 = vadd.f32 %v366, %v652
        %654 = vmatprep.mubr.f32.mxu0 0.0
        %655 = vmatmul.mubr.f32.gmra.mrb[0].mxu0 %v391
        %v656 = vpop.f32.mrb[0].mxu0
        %v657 = vadd.f32 %v362, %v656
        %v658 = vpop.f32.mrb[0].mxu0
        %v659 = vadd.f32 %v366, %v658
        %660 = vmatprep.mubr.f32.mxu0 0.0
        %661 = vmatmul.mubr.f32.gmra.mrb[0].mxu0 %v394
        %v662 = vpop.f32.mrb[0].mxu0
        %v663 = vadd.f32 %v362, %v662
        %v664 = vpop.f32.mrb[0].mxu0
        %v665 = vadd.f32 %v366, %v664
        %666 = vmatprep.mubr.f32.mxu0 0.0
        %667 = vmatmul.mubr.f32.gmra.mrb[0].mxu0 %v397
        %v668 = vpop.f32.mrb[0].mxu0
        %v669 = vadd.f32 %v362, %v668
        %v670 = vpop.f32.mrb[0].mxu0
        %v671 = vadd.f32 %v366, %v670
        %672 = vmatprep.mubr.f32.mxu0 0.0
        %673 = vmatmul.mubr.f32.gmra.mrb[0].mxu0 %v400
        %v674 = vpop.f32.mrb[0].mxu0
        %v675 = vadd.f32 %v362, %v674
        %v676 = vpop.f32.mrb[0].mxu0
        %v677 = vadd.f32 %v366, %v676
        %678 = vmatprep.mubr.f32.mxu0 0.0
        %679 = vmatmul.mubr.f32.gmra.mrb[0].mxu0 %v403
        %v680 = vpop.f32.mrb[0].mxu0
        %v681 = vadd.f32 %v362, %v680
        %v682 = vpop.f32.mrb[0].mxu0
        %v683 = vadd.f32 %v366, %v682
        %684 = vmatprep.mubr.f32.mxu0 0.0
        %685 = vmatmul.mubr.f32.gmra.mrb[0].mxu0 %v406
        %v686 = vpop.f32.mrb[0].mxu0
        %v687 = vadd.f32 %v362, %v686
        %v688 = vpop.f32.mrb[0].mxu0
        %v689 = vadd.f32 %v366, %v688
        %690 = vmatprep.mubr.f32.mxu0 0.0
        %691 = vmatmul.mubr.f32.gmra.mrb[0].mxu0 %v409
        %v692 = vpop.f32.mrb[0].mxu0
        %v693 = vadd.f32 %v362, %v692
        %v694 = vpop.f32.mrb[0].mxu0
        %v695 = vadd.f32 %v366, %v694
        %696 = vdwg.mxu0
        %v697 = vld [vmem:[%s3] sm:$0xff]
        %v698 = vld [vmem:[%s3 + $0x8] sm:$0xff]
        %v699 = vld [vmem:[%s3 + $0x10] sm:$0xff]
        %v700 = vld [vmem:[%s3 + $0x18] sm:$0xff]
        %v701 = vld [vmem:[%s3 + $0x20] sm:$0xff]
        %v702 = vld [vmem:[%s3 + $0x28] sm:$0xff]
        %v703 = vld [vmem:[%s3 + $0x30] sm:$0xff]
        %v704 = vld [vmem:[%s3 + $0x38] sm:$0xff]
        %v705 = vld [vmem:[%s3 + $0x40] sm:$0xff]
        %v706 = vld [vmem:[%s3 + $0x48] sm:$0xff]
        %v707 = vld [vmem:[%s3 + $0x50] sm:$0xff]
        %v708 = vld [vmem:[%s3 + $0x58] sm:$0xff]
        %v709 = vld [vmem:[%s3 + $0x60] sm:$0xff]
        %v710 = vld [vmem:[%s3 + $0x68] sm:$0xff]
        %v711 = vld [vmem:[%s3 + $0x70] sm:$0xff]
        %v712 = vld [vmem:[%s3 + $0x78] sm:$0xff]
        %v713 = vld [vmem:[%s3 + $0x80] sm:$0xff]
        %v714 = vld [vmem:[%s3 + $0x88] sm:$0xff]
        %v715 = vld [vmem:[%s3 + $0x90] sm:$0xff]
        %v716 = vld [vmem:[%s3 + $0x98] sm:$0xff]
        %v717 = vld [vmem:[%s3 + $0xa0] sm:$0xff]
        %v718 = vld [vmem:[%s3 + $0xa8] sm:$0xff]
        %v719 = vld [vmem:[%s3 + $0xb0] sm:$0xff]
        %v720 = vld [vmem:[%s3 + $0xb8] sm:$0xff]
        %v721 = vld [vmem:[%s3 + $0xc0] sm:$0xff]
        %v722 = vld [vmem:[%s3 + $0xc8] sm:$0xff]
        %v723 = vld [vmem:[%s3 + $0xd0] sm:$0xff]
        %v724 = vld [vmem:[%s3 + $0xd8] sm:$0xff]
        %v725 = vld [vmem:[%s3 + $0xe0] sm:$0xff]
        %v726 = vld [vmem:[%s3 + $0xe8] sm:$0xff]
        %v727 = vld [vmem:[%s3 + $0xf0] sm:$0xff]
        %v728 = vld [vmem:[%s3 + $0xf8] sm:$0xff]
        %v729 = vld [vmem:[%s3 + $0x100] sm:$0xff]
        %v730 = vld [vmem:[%s3 + $0x108] sm:$0xff]
        %v731 = vld [vmem:[%s3 + $0x110] sm:$0xff]
        %v732 = vld [vmem:[%s3 + $0x118] sm:$0xff]
        %v733 = vld [vmem:[%s3 + $0x120] sm:$0xff]
        %v734 = vld [vmem:[%s3 + $0x128] sm:$0xff]
        %v735 = vld [vmem:[%s3 + $0x130] sm:$0xff]
        %v736 = vld [vmem:[%s3 + $0x138] sm:$0xff]
        %v737 = vld [vmem:[%s3 + $0x140] sm:$0xff]
        %v738 = vld [vmem:[%s3 + $0x148] sm:$0xff]
        %v739 = vld [vmem:[%s3 + $0x150] sm:$0xff]
        %v740 = vld [vmem:[%s3 + $0x158] sm:$0xff]
        %v741 = vld [vmem:[%s3 + $0x160] sm:$0xff]
        %v742 = vld [vmem:[%s3 + $0x168] sm:$0xff]
        %v743 = vld [vmem:[%s3 + $0x170] sm:$0xff]
        %v744 = vld [vmem:[%s3 + $0x178] sm:$0xff]
        %745 = vmatprep.subr.mxu0 %v698
        %746 = vmatpush1.msra.mxu0 %v697
        %747 = vmatprep.subr.mxu0 %v701
        %748 = vmatpush1.msra.mxu0 %v700
        %749 = vmatprep.subr.mxu0 %v704
        %750 = vmatpush1.msra.mxu0 %v703
        %751 = vmatprep.subr.mxu0 %v707
        %752 = vmatpush1.msra.mxu0 %v706
        %753 = vmatprep.subr.mxu0 %v710
        %754 = vmatpush1.msra.mxu0 %v709
        %755 = vmatprep.subr.mxu0 %v713
        %756 = vmatpush1.msra.mxu0 %v712
        %757 = vmatprep.subr.mxu0 %v716
        %758 = vmatpush1.msra.mxu0 %v715
        %759 = vmatprep.subr.mxu0 %v719
        %760 = vmatpush1.msra.mxu0 %v718
        %761 = vmatprep.subr.mxu0 %v722
        %762 = vmatpush1.msra.mxu0 %v721
        %763 = vmatprep.subr.mxu0 %v725
        %764 = vmatpush1.msra.mxu0 %v724
        %765 = vmatprep.subr.mxu0 %v728
        %766 = vmatpush1.msra.mxu0 %v727
        %767 = vmatprep.subr.mxu0 %v731
        %768 = vmatpush1.msra.mxu0 %v730
        %769 = vmatprep.subr.mxu0 %v734
        %770 = vmatpush1.msra.mxu0 %v733
        %771 = vmatprep.subr.mxu0 %v737
        %772 = vmatpush1.msra.mxu0 %v736
        %773 = vmatprep.subr.mxu0 %v740
        %774 = vmatpush1.msra.mxu0 %v739
        %775 = vmatprep.subr.mxu0 %v743
        %776 = vmatpush1.msra.mxu0 %v742
        %777 = vmatprep.subr.mxu0 0.0
        %778 = vmatpush1.msra.mxu0 0.0
        %779 = vmatprep.subr.mxu0 0.0
        %780 = vmatpush1.msra.mxu0 0.0
        %781 = vmatprep.subr.mxu0 0.0
        %782 = vmatpush1.msra.mxu0 0.0
        %783 = vmatprep.subr.mxu0 0.0
        %784 = vmatpush1.msra.mxu0 0.0
        %785 = vmatprep.subr.mxu0 0.0
        %786 = vmatpush1.msra.mxu0 0.0
        %787 = vmatprep.subr.mxu0 0.0
        %788 = vmatpush1.msra.mxu0 0.0
        %789 = vmatprep.subr.mxu0 0.0
        %790 = vmatpush1.msra.mxu0 0.0
        %791 = vmatprep.subr.mxu0 0.0
        %792 = vmatpush1.msra.mxu0 0.0
        %793 = vmatprep.subr.mxu0 0.0
        %794 = vmatpush1.msra.mxu0 0.0
        %795 = vmatprep.subr.mxu0 0.0
        %796 = vmatpush1.msra.mxu0 0.0
        %797 = vmatprep.subr.mxu0 0.0
        %798 = vmatpush1.msra.mxu0 0.0
        %799 = vmatprep.subr.mxu0 0.0
        %800 = vmatpush1.msra.mxu0 0.0
        %801 = vmatprep.subr.mxu0 0.0
        %802 = vmatpush1.msra.mxu0 0.0
        %803 = vmatprep.subr.mxu0 0.0
        %804 = vmatpush1.msra.mxu0 0.0
        %805 = vmatprep.subr.mxu0 0.0
        %806 = vmatpush1.msra.mxu0 0.0
        %807 = vmatprep.subr.mxu0 0.0
        %808 = vmatpush1.msra.mxu0 0.0
        %809 = vmatprep.mubr.f32.mxu0 0.0
        %810 = vmatmul.mubr.f32.gmra.mrb[0].mxu0 %v328
        %v811 = vpop.f32.mrb[0].mxu0
        %v812 = vadd.f32 0.0, %v811
        %v813 = vpop.f32.mrb[0].mxu0
        %v814 = vadd.f32 0.0, %v813
        %815 = vmatprep.mubr.f32.mxu0 0.0
        %816 = vmatmul.mubr.f32.gmra.mrb[0].mxu0 %v329
        %v817 = vpop.f32.mrb[0].mxu0
        %v818 = vadd.f32 0.0, %v817
        %v819 = vpop.f32.mrb[0].mxu0
        %v820 = vadd.f32 0.0, %v819
        %821 = vmatprep.mubr.f32.mxu0 0.0
        %822 = vmatmul.mubr.f32.gmra.mrb[0].mxu0 %v330
        %v823 = vpop.f32.mrb[0].mxu0
        %v824 = vadd.f32 0.0, %v823
        %v825 = vpop.f32.mrb[0].mxu0
        %v826 = vadd.f32 0.0, %v825
        %827 = vmatprep.mubr.f32.mxu0 0.0
        %828 = vmatmul.mubr.f32.gmra.mrb[0].mxu0 %v331
        %v829 = vpop.f32.mrb[0].mxu0
        %v830 = vadd.f32 0.0, %v829
        %v831 = vpop.f32.mrb[0].mxu0
        %v832 = vadd.f32 0.0, %v831
        %833 = vmatprep.mubr.f32.mxu0 0.0
        %834 = vmatmul.mubr.f32.gmra.mrb[0].mxu0 %v332
        %v835 = vpop.f32.mrb[0].mxu0
        %v836 = vadd.f32 0.0, %v835
        %v837 = vpop.f32.mrb[0].mxu0
        %v838 = vadd.f32 0.0, %v837
        %839 = vmatprep.mubr.f32.mxu0 0.0
        %840 = vmatmul.mubr.f32.gmra.mrb[0].mxu0 %v333
        %v841 = vpop.f32.mrb[0].mxu0
        %v842 = vadd.f32 0.0, %v841
        %v843 = vpop.f32.mrb[0].mxu0
        %v844 = vadd.f32 0.0, %v843
        %845 = vmatprep.mubr.f32.mxu0 0.0
        %846 = vmatmul.mubr.f32.gmra.mrb[0].mxu0 %v334
        %v847 = vpop.f32.mrb[0].mxu0
        %v848 = vadd.f32 0.0, %v847
        %v849 = vpop.f32.mrb[0].mxu0
        %v850 = vadd.f32 0.0, %v849
        %851 = vmatprep.mubr.f32.mxu0 0.0
        %852 = vmatmul.mubr.f32.gmra.mrb[0].mxu0 %v335
        %v853 = vpop.f32.mrb[0].mxu0
        %v854 = vadd.f32 0.0, %v853
        %v855 = vpop.f32.mrb[0].mxu0
        %v856 = vadd.f32 0.0, %v855
        %857 = vmatprep.mubr.f32.mxu0 0.0
        %858 = vmatmul.mubr.f32.gmra.mrb[0].mxu0 %v336
        %v859 = vpop.f32.mrb[0].mxu0
        %v860 = vadd.f32 0.0, %v859
        %v861 = vpop.f32.mrb[0].mxu0
        %v862 = vadd.f32 0.0, %v861
        %863 = vmatprep.mubr.f32.mxu0 0.0
        %864 = vmatmul.mubr.f32.gmra.mrb[0].mxu0 %v337
        %v865 = vpop.f32.mrb[0].mxu0
        %v866 = vadd.f32 0.0, %v865
        %v867 = vpop.f32.mrb[0].mxu0
        %v868 = vadd.f32 0.0, %v867
        %869 = vmatprep.mubr.f32.mxu0 0.0
        %870 = vmatmul.mubr.f32.gmra.mrb[0].mxu0 %v338
        %v871 = vpop.f32.mrb[0].mxu0
        %v872 = vadd.f32 0.0, %v871
        %v873 = vpop.f32.mrb[0].mxu0
        %v874 = vadd.f32 0.0, %v873
        %875 = vmatprep.mubr.f32.mxu0 0.0
        %876 = vmatmul.mubr.f32.gmra.mrb[0].mxu0 %v339
        %v877 = vpop.f32.mrb[0].mxu0
        %v878 = vadd.f32 0.0, %v877
        %v879 = vpop.f32.mrb[0].mxu0
        %v880 = vadd.f32 0.0, %v879
        %881 = vmatprep.mubr.f32.mxu0 0.0
        %882 = vmatmul.mubr.f32.gmra.mrb[0].mxu0 %v340
        %v883 = vpop.f32.mrb[0].mxu0
        %v884 = vadd.f32 0.0, %v883
        %v885 = vpop.f32.mrb[0].mxu0
        %v886 = vadd.f32 0.0, %v885
        %887 = vdwg.mxu0
        %888 = vmatprep.subr.mxu0 0.0
        %889 = vmatpush1.msra.mxu0 %v699
        %890 = vmatprep.subr.mxu0 0.0
        %891 = vmatpush1.msra.mxu0 %v702
        %892 = vmatprep.subr.mxu0 0.0
        %893 = vmatpush1.msra.mxu0 %v705
        %894 = vmatprep.subr.mxu0 0.0
        %895 = vmatpush1.msra.mxu0 %v708
        %896 = vmatprep.subr.mxu0 0.0
        %897 = vmatpush1.msra.mxu0 %v711
        %898 = vmatprep.subr.mxu0 0.0
        %899 = vmatpush1.msra.mxu0 %v714
        %900 = vmatprep.subr.mxu0 0.0
        %901 = vmatpush1.msra.mxu0 %v717
        %902 = vmatprep.subr.mxu0 0.0
        %903 = vmatpush1.msra.mxu0 %v720
        %904 = vmatprep.subr.mxu0 0.0
        %905 = vmatpush1.msra.mxu0 %v723
        %906 = vmatprep.subr.mxu0 0.0
        %907 = vmatpush1.msra.mxu0 %v726
        %908 = vmatprep.subr.mxu0 0.0
        %909 = vmatpush1.msra.mxu0 %v729
        %910 = vmatprep.subr.mxu0 0.0
        %911 = vmatpush1.msra.mxu0 %v732
        %912 = vmatprep.subr.mxu0 0.0
        %913 = vmatpush1.msra.mxu0 %v735
        %914 = vmatprep.subr.mxu0 0.0
        %915 = vmatpush1.msra.mxu0 %v738
        %916 = vmatprep.subr.mxu0 0.0
        %917 = vmatpush1.msra.mxu0 %v741
        %918 = vmatprep.subr.mxu0 0.0
        %919 = vmatpush1.msra.mxu0 %v744
        %920 = vmatprep.subr.mxu0 0.0
        %921 = vmatpush1.msra.mxu0 0.0
        %922 = vmatprep.subr.mxu0 0.0
        %923 = vmatpush1.msra.mxu0 0.0
        %924 = vmatprep.subr.mxu0 0.0
        %925 = vmatpush1.msra.mxu0 0.0
        %926 = vmatprep.subr.mxu0 0.0
        %927 = vmatpush1.msra.mxu0 0.0
        %928 = vmatprep.subr.mxu0 0.0
        %929 = vmatpush1.msra.mxu0 0.0
        %930 = vmatprep.subr.mxu0 0.0
        %931 = vmatpush1.msra.mxu0 0.0
        %932 = vmatprep.subr.mxu0 0.0
        %933 = vmatpush1.msra.mxu0 0.0
        %934 = vmatprep.subr.mxu0 0.0
        %935 = vmatpush1.msra.mxu0 0.0
        %936 = vmatprep.subr.mxu0 0.0
        %937 = vmatpush1.msra.mxu0 0.0
        %938 = vmatprep.subr.mxu0 0.0
        %939 = vmatpush1.msra.mxu0 0.0
        %940 = vmatprep.subr.mxu0 0.0
        %941 = vmatpush1.msra.mxu0 0.0
        %942 = vmatprep.subr.mxu0 0.0
        %943 = vmatpush1.msra.mxu0 0.0
        %944 = vmatprep.subr.mxu0 0.0
        %945 = vmatpush1.msra.mxu0 0.0
        %946 = vmatprep.subr.mxu0 0.0
        %947 = vmatpush1.msra.mxu0 0.0
        %948 = vmatprep.subr.mxu0 0.0
        %949 = vmatpush1.msra.mxu0 0.0
        %950 = vmatprep.subr.mxu0 0.0
        %951 = vmatpush1.msra.mxu0 0.0
        %952 = vmatprep.mubr.f32.mxu0 0.0
        %953 = vmatmul.mubr.f32.gmra.mrb[0].mxu0 %v328
        %v954 = vpop.f32.mrb[0].mxu0
        %v955 = vadd.f32 0.0, %v954
        %v956 = vpop.f32.mrb[0].mxu0
        %957 = vmatprep.mubr.f32.mxu0 0.0
        %958 = vmatmul.mubr.f32.gmra.mrb[0].mxu0 %v329
        %v959 = vpop.f32.mrb[0].mxu0
        %v960 = vadd.f32 0.0, %v959
        %v961 = vpop.f32.mrb[0].mxu0
        %962 = vmatprep.mubr.f32.mxu0 0.0
        %963 = vmatmul.mubr.f32.gmra.mrb[0].mxu0 %v330
        %v964 = vpop.f32.mrb[0].mxu0
        %v965 = vadd.f32 0.0, %v964
        %v966 = vpop.f32.mrb[0].mxu0
        %967 = vmatprep.mubr.f32.mxu0 0.0
        %968 = vmatmul.mubr.f32.gmra.mrb[0].mxu0 %v331
        %v969 = vpop.f32.mrb[0].mxu0
        %v970 = vadd.f32 0.0, %v969
        %v971 = vpop.f32.mrb[0].mxu0
        %972 = vmatprep.mubr.f32.mxu0 0.0
        %973 = vmatmul.mubr.f32.gmra.mrb[0].mxu0 %v332
        %v974 = vpop.f32.mrb[0].mxu0
        %v975 = vadd.f32 0.0, %v974
        %v976 = vpop.f32.mrb[0].mxu0
        %977 = vmatprep.mubr.f32.mxu0 0.0
        %978 = vmatmul.mubr.f32.gmra.mrb[0].mxu0 %v333
        %v979 = vpop.f32.mrb[0].mxu0
        %v980 = vadd.f32 0.0, %v979
        %v981 = vpop.f32.mrb[0].mxu0
        %982 = vmatprep.mubr.f32.mxu0 0.0
        %983 = vmatmul.mubr.f32.gmra.mrb[0].mxu0 %v334
        %v984 = vpop.f32.mrb[0].mxu0
        %v985 = vadd.f32 0.0, %v984
        %v986 = vpop.f32.mrb[0].mxu0
        %987 = vmatprep.mubr.f32.mxu0 0.0
        %988 = vmatmul.mubr.f32.gmra.mrb[0].mxu0 %v335
        %v989 = vpop.f32.mrb[0].mxu0
        %v990 = vadd.f32 0.0, %v989
        %v991 = vpop.f32.mrb[0].mxu0
        %992 = vmatprep.mubr.f32.mxu0 0.0
        %993 = vmatmul.mubr.f32.gmra.mrb[0].mxu0 %v336
        %v994 = vpop.f32.mrb[0].mxu0
        %v995 = vadd.f32 0.0, %v994
        %v996 = vpop.f32.mrb[0].mxu0
        %997 = vmatprep.mubr.f32.mxu0 0.0
        %998 = vmatmul.mubr.f32.gmra.mrb[0].mxu0 %v337
        %v999 = vpop.f32.mrb[0].mxu0
        %v1000 = vadd.f32 0.0, %v999
        %v1001 = vpop.f32.mrb[0].mxu0
        %1002 = vmatprep.mubr.f32.mxu0 0.0
        %1003 = vmatmul.mubr.f32.gmra.mrb[0].mxu0 %v338
        %v1004 = vpop.f32.mrb[0].mxu0
        %v1005 = vadd.f32 0.0, %v1004
        %v1006 = vpop.f32.mrb[0].mxu0
        %1007 = vmatprep.mubr.f32.mxu0 0.0
        %1008 = vmatmul.mubr.f32.gmra.mrb[0].mxu0 %v339
        %v1009 = vpop.f32.mrb[0].mxu0
        %v1010 = vadd.f32 0.0, %v1009
        %v1011 = vpop.f32.mrb[0].mxu0
        %1012 = vmatprep.mubr.f32.mxu0 0.0
        %1013 = vmatmul.mubr.f32.gmra.mrb[0].mxu0 %v340
        %v1014 = vpop.f32.mrb[0].mxu0
        %v1015 = vadd.f32 0.0, %v1014
        %v1016 = vpop.f32.mrb[0].mxu0
        %1017 = vdwg.mxu0
        %v1018 = vadd.f32 %v478, %v812
        %v1019 = vadd.f32 %v480, %v814
        %v1020 = vadd.f32 %v621, %v955
        %v1021 = vadd.f32 %v484, %v818
        %v1022 = vadd.f32 %v486, %v820
        %v1023 = vadd.f32 %v627, %v960
        %v1024 = vadd.f32 %v490, %v824
        %v1025 = vadd.f32 %v492, %v826
        %v1026 = vadd.f32 %v633, %v965
        %v1027 = vadd.f32 %v496, %v830
        %v1028 = vadd.f32 %v498, %v832
        %v1029 = vadd.f32 %v639, %v970
        %v1030 = vadd.f32 %v502, %v836
        %v1031 = vadd.f32 %v504, %v838
        %v1032 = vadd.f32 %v645, %v975
        %v1033 = vadd.f32 %v508, %v842
        %v1034 = vadd.f32 %v510, %v844
        %v1035 = vadd.f32 %v651, %v980
        %v1036 = vadd.f32 %v514, %v848
        %v1037 = vadd.f32 %v516, %v850
        %v1038 = vadd.f32 %v657, %v985
        %v1039 = vadd.f32 %v520, %v854
        %v1040 = vadd.f32 %v522, %v856
        %v1041 = vadd.f32 %v663, %v990
        %v1042 = vadd.f32 %v526, %v860
        %v1043 = vadd.f32 %v528, %v862
        %v1044 = vadd.f32 %v669, %v995
        %v1045 = vadd.f32 %v532, %v866
        %v1046 = vadd.f32 %v534, %v868
        %v1047 = vadd.f32 %v675, %v1000
        %v1048 = vadd.f32 %v538, %v872
        %v1049 = vadd.f32 %v540, %v874
        %v1050 = vadd.f32 %v681, %v1005
        %v1051 = vadd.f32 %v544, %v878
        %v1052 = vadd.f32 %v546, %v880
        %v1053 = vadd.f32 %v687, %v1010
        %v1054 = vadd.f32 %v550, %v884
        %v1055 = vadd.f32 %v552, %v886
        %v1056 = vadd.f32 %v693, %v1015
        %v1057 = vmax.f32 %v1018, 0.0
        %v1058 = vmax.f32 %v1021, 0.0
        %v1059 = vmax.f32 %v1024, 0.0
        %v1060 = vmax.f32 %v1027, 0.0
        %v1061 = vmax.f32 %v1030, 0.0
        %v1062 = vmax.f32 %v1033, 0.0
        %v1063 = vmax.f32 %v1036, 0.0
        %v1064 = vmax.f32 %v1039, 0.0
        %v1065 = vmax.f32 %v1042, 0.0
        %v1066 = vmax.f32 %v1045, 0.0
        %v1067 = vmax.f32 %v1048, 0.0
        %v1068 = vmax.f32 %v1051, 0.0
        %v1069 = vmax.f32 %v1054, 0.0
        %v1070 = vmax.f32 %v1019, 0.0
        %v1071 = vmax.f32 %v1022, 0.0
        %v1072 = vmax.f32 %v1025, 0.0
        %v1073 = vmax.f32 %v1028, 0.0
        %v1074 = vmax.f32 %v1031, 0.0
        %v1075 = vmax.f32 %v1034, 0.0
        %v1076 = vmax.f32 %v1037, 0.0
        %v1077 = vmax.f32 %v1040, 0.0
        %v1078 = vmax.f32 %v1043, 0.0
        %v1079 = vmax.f32 %v1046, 0.0
        %v1080 = vmax.f32 %v1049, 0.0
        %v1081 = vmax.f32 %v1052, 0.0
        %v1082 = vmax.f32 %v1055, 0.0
        %v1083 = vmax.f32 %v1020, 0.0
        %v1084 = vmax.f32 %v1023, 0.0
        %v1085 = vmax.f32 %v1026, 0.0
        %v1086 = vmax.f32 %v1029, 0.0
        %v1087 = vmax.f32 %v1032, 0.0
        %v1088 = vmax.f32 %v1035, 0.0
        %v1089 = vmax.f32 %v1038, 0.0
        %v1090 = vmax.f32 %v1041, 0.0
        %v1091 = vmax.f32 %v1044, 0.0
        %v1092 = vmax.f32 %v1047, 0.0
        %v1093 = vmax.f32 %v1050, 0.0
        %v1094 = vmax.f32 %v1053, 0.0
        %v1095 = vmax.f32 %v1056, 0.0
        %v1096 = vmul.f32 %v328, %v1083
        %v1097 = vmul.f32 %v329, %v1084
        %v1098 = vmul.f32 %v330, %v1085
        %v1099 = vmul.f32 %v331, %v1086
        %v1100 = vmul.f32 %v332, %v1087
        %v1101 = vmul.f32 %v333, %v1088
        %v1102 = vmul.f32 %v334, %v1089
        %v1103 = vmul.f32 %v335, %v1090
        %v1104 = vmul.f32 %v336, %v1091
        %v1105 = vmul.f32 %v337, %v1092
        %v1106 = vmul.f32 %v338, %v1093
        %v1107 = vmul.f32 %v339, %v1094
        %v1108 = vmul.f32 %v340, %v1095
        %v1109 = vld [vmem:[%s4] sm:$0xff]
        %v1110 = vld [vmem:[%s4 + $0x8] sm:$0xff]
        %v1111 = vld [vmem:[%s4 + $0x10] sm:$0xff]
        %v1112 = vld [vmem:[%s4 + $0x18] sm:$0xff]
        %v1113 = vld [vmem:[%s4 + $0x20] sm:$0xff]
        %v1114 = vld [vmem:[%s4 + $0x28] sm:$0xff]
        %v1115 = vld [vmem:[%s4 + $0x30] sm:$0xff]
        %v1116 = vld [vmem:[%s4 + $0x38] sm:$0xff]
        %v1117 = vld [vmem:[%s4 + $0x40] sm:$0xff]
        %v1118 = vld [vmem:[%s4 + $0x48] sm:$0xff]
        %v1119 = vld [vmem:[%s4 + $0x50] sm:$0xff]
        %v1120 = vld [vmem:[%s4 + $0x58] sm:$0xff]
        %v1121 = vld [vmem:[%s4 + $0x60] sm:$0xff]
        %v1122 = vld [vmem:[%s4 + $0x68] sm:$0xff]
        %v1123 = vld [vmem:[%s4 + $0x70] sm:$0xff]
        %v1124 = vld [vmem:[%s4 + $0x78] sm:$0xff]
        %1125 = vmatprep.subr.mxu0 0.0
        %1126 = vmatpush1.msra.mxu0 %v1109
        %1127 = vmatprep.subr.mxu0 0.0
        %1128 = vmatpush1.msra.mxu0 %v1110
        %1129 = vmatprep.subr.mxu0 0.0
        %1130 = vmatpush1.msra.mxu0 %v1111
        %1131 = vmatprep.subr.mxu0 0.0
        %1132 = vmatpush1.msra.mxu0 %v1112
        %1133 = vmatprep.subr.mxu0 0.0
        %1134 = vmatpush1.msra.mxu0 %v1113
        %1135 = vmatprep.subr.mxu0 0.0
        %1136 = vmatpush1.msra.mxu0 %v1114
        %1137 = vmatprep.subr.mxu0 0.0
        %1138 = vmatpush1.msra.mxu0 %v1115
        %1139 = vmatprep.subr.mxu0 0.0
        %1140 = vmatpush1.msra.mxu0 %v1116
        %1141 = vmatprep.subr.mxu0 0.0
        %1142 = vmatpush1.msra.mxu0 %v1117
        %1143 = vmatprep.subr.mxu0 0.0
        %1144 = vmatpush1.msra.mxu0 %v1118
        %1145 = vmatprep.subr.mxu0 0.0
        %1146 = vmatpush1.msra.mxu0 %v1119
        %1147 = vmatprep.subr.mxu0 0.0
        %1148 = vmatpush1.msra.mxu0 %v1120
        %1149 = vmatprep.subr.mxu0 0.0
        %1150 = vmatpush1.msra.mxu0 %v1121
        %1151 = vmatprep.subr.mxu0 0.0
        %1152 = vmatpush1.msra.mxu0 %v1122
        %1153 = vmatprep.subr.mxu0 0.0
        %1154 = vmatpush1.msra.mxu0 %v1123
        %1155 = vmatprep.subr.mxu0 0.0
        %1156 = vmatpush1.msra.mxu0 %v1124
        %1157 = vmatprep.subr.mxu0 0.0
        %1158 = vmatpush1.msra.mxu0 0.0
        %1159 = vmatprep.subr.mxu0 0.0
        %1160 = vmatpush1.msra.mxu0 0.0
        %1161 = vmatprep.subr.mxu0 0.0
        %1162 = vmatpush1.msra.mxu0 0.0
        %1163 = vmatprep.subr.mxu0 0.0
        %1164 = vmatpush1.msra.mxu0 0.0
        %1165 = vmatprep.subr.mxu0 0.0
        %1166 = vmatpush1.msra.mxu0 0.0
        %1167 = vmatprep.subr.mxu0 0.0
        %1168 = vmatpush1.msra.mxu0 0.0
        %1169 = vmatprep.subr.mxu0 0.0
        %1170 = vmatpush1.msra.mxu0 0.0
        %1171 = vmatprep.subr.mxu0 0.0
        %1172 = vmatpush1.msra.mxu0 0.0
        %1173 = vmatprep.subr.mxu0 0.0
        %1174 = vmatpush1.msra.mxu0 0.0
        %1175 = vmatprep.subr.mxu0 0.0
        %1176 = vmatpush1.msra.mxu0 0.0
        %1177 = vmatprep.subr.mxu0 0.0
        %1178 = vmatpush1.msra.mxu0 0.0
        %1179 = vmatprep.subr.mxu0 0.0
        %1180 = vmatpush1.msra.mxu0 0.0
        %1181 = vmatprep.subr.mxu0 0.0
        %1182 = vmatpush1.msra.mxu0 0.0
        %1183 = vmatprep.subr.mxu0 0.0
        %1184 = vmatpush1.msra.mxu0 0.0
        %1185 = vmatprep.subr.mxu0 0.0
        %1186 = vmatpush1.msra.mxu0 0.0
        %1187 = vmatprep.subr.mxu0 0.0
        %1188 = vmatpush1.msra.mxu0 0.0
        %1189 = vmatprep.mubr.f32.mxu0 0.0
        %1190 = vmatmul.mubr.f32.gmra.mrb[0].mxu0 %v1096
        %v1191 = vpop.f32.mrb[0].mxu0
        %v1192 = vadd.f32 0.0, %v1191
        %v1193 = vpop.f32.mrb[0].mxu0
        %1194 = vmatprep.mubr.f32.mxu0 0.0
        %1195 = vmatmul.mubr.f32.gmra.mrb[0].mxu0 %v1097
        %v1196 = vpop.f32.mrb[0].mxu0
        %v1197 = vadd.f32 0.0, %v1196
        %v1198 = vpop.f32.mrb[0].mxu0
        %1199 = vmatprep.mubr.f32.mxu0 0.0
        %1200 = vmatmul.mubr.f32.gmra.mrb[0].mxu0 %v1098
        %v1201 = vpop.f32.mrb[0].mxu0
        %v1202 = vadd.f32 0.0, %v1201
        %v1203 = vpop.f32.mrb[0].mxu0
        %1204 = vmatprep.mubr.f32.mxu0 0.0
        %1205 = vmatmul.mubr.f32.gmra.mrb[0].mxu0 %v1099
        %v1206 = vpop.f32.mrb[0].mxu0
        %v1207 = vadd.f32 0.0, %v1206
        %v1208 = vpop.f32.mrb[0].mxu0
        %1209 = vmatprep.mubr.f32.mxu0 0.0
        %1210 = vmatmul.mubr.f32.gmra.mrb[0].mxu0 %v1100
        %v1211 = vpop.f32.mrb[0].mxu0
        %v1212 = vadd.f32 0.0, %v1211
        %v1213 = vpop.f32.mrb[0].mxu0
        %1214 = vmatprep.mubr.f32.mxu0 0.0
        %1215 = vmatmul.mubr.f32.gmra.mrb[0].mxu0 %v1101
        %v1216 = vpop.f32.mrb[0].mxu0
        %v1217 = vadd.f32 0.0, %v1216
        %v1218 = vpop.f32.mrb[0].mxu0
        %1219 = vmatprep.mubr.f32.mxu0 0.0
        %1220 = vmatmul.mubr.f32.gmra.mrb[0].mxu0 %v1102
        %v1221 = vpop.f32.mrb[0].mxu0
        %v1222 = vadd.f32 0.0, %v1221
        %v1223 = vpop.f32.mrb[0].mxu0
        %1224 = vmatprep.mubr.f32.mxu0 0.0
        %1225 = vmatmul.mubr.f32.gmra.mrb[0].mxu0 %v1103
        %v1226 = vpop.f32.mrb[0].mxu0
        %v1227 = vadd.f32 0.0, %v1226
        %v1228 = vpop.f32.mrb[0].mxu0
        %1229 = vmatprep.mubr.f32.mxu0 0.0
        %1230 = vmatmul.mubr.f32.gmra.mrb[0].mxu0 %v1104
        %v1231 = vpop.f32.mrb[0].mxu0
        %v1232 = vadd.f32 0.0, %v1231
        %v1233 = vpop.f32.mrb[0].mxu0
        %1234 = vmatprep.mubr.f32.mxu0 0.0
        %1235 = vmatmul.mubr.f32.gmra.mrb[0].mxu0 %v1105
        %v1236 = vpop.f32.mrb[0].mxu0
        %v1237 = vadd.f32 0.0, %v1236
        %v1238 = vpop.f32.mrb[0].mxu0
        %1239 = vmatprep.mubr.f32.mxu0 0.0
        %1240 = vmatmul.mubr.f32.gmra.mrb[0].mxu0 %v1106
        %v1241 = vpop.f32.mrb[0].mxu0
        %v1242 = vadd.f32 0.0, %v1241
        %v1243 = vpop.f32.mrb[0].mxu0
        %1244 = vmatprep.mubr.f32.mxu0 0.0
        %1245 = vmatmul.mubr.f32.gmra.mrb[0].mxu0 %v1107
        %v1246 = vpop.f32.mrb[0].mxu0
        %v1247 = vadd.f32 0.0, %v1246
        %v1248 = vpop.f32.mrb[0].mxu0
        %1249 = vmatprep.mubr.f32.mxu0 0.0
        %1250 = vmatmul.mubr.f32.gmra.mrb[0].mxu0 %v1108
        %v1251 = vpop.f32.mrb[0].mxu0
        %v1252 = vadd.f32 0.0, %v1251
        %v1253 = vpop.f32.mrb[0].mxu0
        %1254 = vdwg.mxu0
        %v1255 = vadd.f32 %v623, %v1192
        %v1256 = vadd.f32 %v629, %v1197
        %v1257 = vadd.f32 %v635, %v1202
        %v1258 = vadd.f32 %v641, %v1207
        %v1259 = vadd.f32 %v647, %v1212
        %v1260 = vadd.f32 %v653, %v1217
        %v1261 = vadd.f32 %v659, %v1222
        %v1262 = vadd.f32 %v665, %v1227
        %v1263 = vadd.f32 %v671, %v1232
        %v1264 = vadd.f32 %v677, %v1237
        %v1265 = vadd.f32 %v683, %v1242
        %v1266 = vadd.f32 %v689, %v1247
        %v1267 = vadd.f32 %v695, %v1252
        %v1268 = vmax.f32 %v1255, 0.0
        %v1269 = vmax.f32 %v1256, 0.0
        %v1270 = vmax.f32 %v1257, 0.0
        %v1271 = vmax.f32 %v1258, 0.0
        %v1272 = vmax.f32 %v1259, 0.0
        %v1273 = vmax.f32 %v1260, 0.0
        %v1274 = vmax.f32 %v1261, 0.0
        %v1275 = vmax.f32 %v1262, 0.0
        %v1276 = vmax.f32 %v1263, 0.0
        %v1277 = vmax.f32 %v1264, 0.0
        %v1278 = vmax.f32 %v1265, 0.0
        %v1279 = vmax.f32 %v1266, 0.0
        %v1280 = vmax.f32 %v1267, 0.0
        %v1281 = vsub.f32 1.0, %v1070
        %v1282 = vsub.f32 1.0, %v1071
        %v1283 = vsub.f32 1.0, %v1072
        %v1284 = vsub.f32 1.0, %v1073
        %v1285 = vsub.f32 1.0, %v1074
        %v1286 = vsub.f32 1.0, %v1075
        %v1287 = vsub.f32 1.0, %v1076
        %v1288 = vsub.f32 1.0, %v1077
        %v1289 = vsub.f32 1.0, %v1078
        %v1290 = vsub.f32 1.0, %v1079
        %v1291 = vsub.f32 1.0, %v1080
        %v1292 = vsub.f32 1.0, %v1081
        %v1293 = vsub.f32 1.0, %v1082
        %v1294 = vmul.f32 %v1281, %v1268
        %v1295 = vmul.f32 %v1282, %v1269
        %v1296 = vmul.f32 %v1283, %v1270
        %v1297 = vmul.f32 %v1284, %v1271
        %v1298 = vmul.f32 %v1285, %v1272
        %v1299 = vmul.f32 %v1286, %v1273
        %v1300 = vmul.f32 %v1287, %v1274
        %v1301 = vmul.f32 %v1288, %v1275
        %v1302 = vmul.f32 %v1289, %v1276
        %v1303 = vmul.f32 %v1290, %v1277
        %v1304 = vmul.f32 %v1291, %v1278
        %v1305 = vmul.f32 %v1292, %v1279
        %v1306 = vmul.f32 %v1293, %v1280
        %v1307 = vmul.f32 %v1057, %v328
        %v1308 = vmul.f32 %v1058, %v329
        %v1309 = vmul.f32 %v1059, %v330
        %v1310 = vmul.f32 %v1060, %v331
        %v1311 = vmul.f32 %v1061, %v332
        %v1312 = vmul.f32 %v1062, %v333
        %v1313 = vmul.f32 %v1063, %v334
        %v1314 = vmul.f32 %v1064, %v335
        %v1315 = vmul.f32 %v1065, %v336
        %v1316 = vmul.f32 %v1066, %v337
        %v1317 = vmul.f32 %v1067, %v338
        %v1318 = vmul.f32 %v1068, %v339
        %v1319 = vmul.f32 %v1069, %v340
        %v1320 = vadd.f32 %v1294, %v1307
        %v1321 = vadd.f32 %v1295, %v1308
        %v1322 = vadd.f32 %v1296, %v1309
        %v1323 = vadd.f32 %v1297, %v1310
        %v1324 = vadd.f32 %v1298, %v1311
        %v1325 = vadd.f32 %v1299, %v1312
        %v1326 = vadd.f32 %v1300, %v1313
        %v1327 = vadd.f32 %v1301, %v1314
        %v1328 = vadd.f32 %v1302, %v1315
        %v1329 = vadd.f32 %v1303, %v1316
        %v1330 = vadd.f32 %v1304, %v1317
        %v1331 = vadd.f32 %v1305, %v1318
        %v1332 = vadd.f32 %v1306, %v1319
        %1333 = vst [vmem:[%s281] sm:$0xff] %v1320
        %1334 = vst [vmem:[%s281 + $0x8] sm:$0xff] %v1321
        %1335 = vst [vmem:[%s281 + $0x10] sm:$0xff] %v1322
        %1336 = vst [vmem:[%s281 + $0x18] sm:$0xff] %v1323
        %1337 = vst [vmem:[%s281 + $0x20] sm:$0xff] %v1324
        %1338 = vst [vmem:[%s281 + $0x28] sm:$0xff] %v1325
        %1339 = vst [vmem:[%s281 + $0x30] sm:$0xff] %v1326
        %1340 = vst [vmem:[%s281 + $0x38] sm:$0xff] %v1327
        %1341 = vst [vmem:[%s281 + $0x40] sm:$0xff] %v1328
        %1342 = vst [vmem:[%s281 + $0x48] sm:$0xff] %v1329
        %1343 = vst [vmem:[%s281 + $0x50] sm:$0xff] %v1330
        %1344 = vst [vmem:[%s281 + $0x58] sm:$0xff] %v1331
        %1345 = vst [vmem:[%s281 + $0x60] sm:$0xff] %v1332
        %s1346 = sand.u32 %s161, 1
        %s1347 = sand.u32 %s161, 1
        %s1348 = smul.addr %s1347, 104
        %s1349 = scalar_lea.vmem [#allocation2], %s1348
        // Predicated region
        $region45: #{dgm_layer_forward.1} parent=43 // pred_check
          %p1350 = pneg %p171
        $region46: #{dgm_layer_forward.1} parent=43 // pred_check_branch
          %1352 = sbr.rel (%p1350) target = $region48
        $region47: #{dgm_layer_forward.1} parent=43 // pred_region
          %s1353 = smul.u32 13, %s17
          %s1354 = ssub.s32 25, %s1353
          %p1355 = scmp.lt.s32.totalorder %s1354, 13
          %s1356 = scalar_select %p1355, %s1354, 13
          %s1357 = smul.u32 128, %s1356
          %p1358 = scmp.ne.s32.totalorder 0, %s1357
          %s1359 = smul.addr %s1353, 8
          %s1360 = scalar_lea.vmem %s6, %s1359
          // Predicated region
          $region49: #{dgm_layer_forward.1} parent=47 // pred_check
            %p1361 = pneg %p1358
          $region50: #{dgm_layer_forward.1} parent=47 // pred_check_branch
            %1363 = sbr.rel (%p1361) target = $region52
          $region51: #{dgm_layer_forward.1} parent=47 // pred_region
            // Predicated region
            $region53: #{dgm_layer_forward.1} parent=51 // pred_check
              _
            $region54: #{dgm_layer_forward.1} parent=51 // pred_check_branch
              %1365 = sbr.rel (0) target = $region56
            $region55: #{dgm_layer_forward.1} parent=51 // pred_region
              // Predicated region
              $region75: #{dgm_layer_forward.1} parent=55 // pred_check
                _
              $region76: #{dgm_layer_forward.1} parent=55 // pred_check_branch
                %1439 = sbr.rel (0) target = $region78
              $region77: #{dgm_layer_forward.1} parent=55 // pred_region
                %s1440 = sdiv.u32.pop %s1356, 13
                %s1441 = srem.u32.pop %s1356, 13
                // While loop
                $region79: #{dgm_layer_forward.1} parent=77 // loop_pre_header
                  _
                $region80: #{dgm_layer_forward.1} parent=77 // loop_header
                  %s1443 = sphi 0, %s1445
                  %p1444 = scmp.ge.s32.totalorder %s1443, %s1440
                  %s1448 = sphi 0, %s1479
                  %s1449 = sphi %s1349, %s1482
                  %s1450 = sphi %s1360, %s1483
                $region81: #{dgm_layer_forward.1} parent=77 // loop_header_branch
                  %1447 = sbr.rel (%p1444) target = $region85
                $region82: #{dgm_layer_forward.1} parent=77 // loop_body
                  %v1451 = vld [vmem:[%s1449] sm:$0xff]
                  %1452 = vst [vmem:[%s1450] sm:$0xff] %v1451
                  %v1453 = vld [vmem:[%s1449 + $0x8] sm:$0xff]
                  %1454 = vst [vmem:[%s1450 + $0x8] sm:$0xff] %v1453
                  %v1455 = vld [vmem:[%s1449 + $0x10] sm:$0xff]
                  %1456 = vst [vmem:[%s1450 + $0x10] sm:$0xff] %v1455
                  %v1457 = vld [vmem:[%s1449 + $0x18] sm:$0xff]
                  %1458 = vst [vmem:[%s1450 + $0x18] sm:$0xff] %v1457
                  %v1459 = vld [vmem:[%s1449 + $0x20] sm:$0xff]
                  %1460 = vst [vmem:[%s1450 + $0x20] sm:$0xff] %v1459
                  %v1461 = vld [vmem:[%s1449 + $0x28] sm:$0xff]
                  %1462 = vst [vmem:[%s1450 + $0x28] sm:$0xff] %v1461
                  %v1463 = vld [vmem:[%s1449 + $0x30] sm:$0xff]
                  %1464 = vst [vmem:[%s1450 + $0x30] sm:$0xff] %v1463
                  %v1465 = vld [vmem:[%s1449 + $0x38] sm:$0xff]
                  %1466 = vst [vmem:[%s1450 + $0x38] sm:$0xff] %v1465
                  %v1467 = vld [vmem:[%s1449 + $0x40] sm:$0xff]
                  %1468 = vst [vmem:[%s1450 + $0x40] sm:$0xff] %v1467
                  %v1469 = vld [vmem:[%s1449 + $0x48] sm:$0xff]
                  %1470 = vst [vmem:[%s1450 + $0x48] sm:$0xff] %v1469
                  %v1471 = vld [vmem:[%s1449 + $0x50] sm:$0xff]
                  %1472 = vst [vmem:[%s1450 + $0x50] sm:$0xff] %v1471
                  %v1473 = vld [vmem:[%s1449 + $0x58] sm:$0xff]
                  %1474 = vst [vmem:[%s1450 + $0x58] sm:$0xff] %v1473
                  %v1475 = vld [vmem:[%s1449 + $0x60] sm:$0xff]
                  %1476 = vst [vmem:[%s1450 + $0x60] sm:$0xff] %v1475
                  %s1477 = sadd.s32 1, %s1448
                  %p1478 = scmp.ge.s32.totalorder %s1477, %s1440
                  %s1479 = scalar_select %p1478, 0, %s1477
                  %s1480 = smul.u32 %s1479, 104
                  %s1481 = smul.u32 %s1479, 104
                  %s1482 = scalar_lea.vmem %s1349, %s1480 [#allocation2]
                  %s1483 = scalar_lea.vmem %s1360, %s1481
                $region83: #{dgm_layer_forward.1} parent=77 // loop_footer
                  %s1445 = sadd.s32 %s1443, 1
                $region84: #{dgm_layer_forward.1} parent=77 // loop_footer_branch
                  %1442 = sbr.rel target = $region80
                $region85: #{dgm_layer_forward.1} parent=77 // loop_exit
                  _
                %s1484 = sdiv.u32.pop %s1356, 13
                %s1485 = srem.u32.pop %s1356, 13
                %s1486 = smul.u32 %s1484, 13
                %s1487 = smul.u32 8, %s1486
                %s1488 = scalar_lea.vmem %s1349, %s1487 [#allocation2]
                %s1489 = smul.u32 8, %s1486
                %s1490 = scalar_lea.vmem %s1360, %s1489
                // While loop
                $region86: #{dgm_layer_forward.1} parent=77 // loop_pre_header
                  _
                $region87: #{dgm_layer_forward.1} parent=77 // loop_header
                  %s1492 = sphi 0, %s1494
                  %p1493 = scmp.ge.s32.totalorder %s1492, %s1485
                  %s1497 = sphi 0, %s1504
                  %s1498 = sphi %s1488, %s1507
                  %s1499 = sphi %s1490, %s1508
                $region88: #{dgm_layer_forward.1} parent=77 // loop_header_branch
                  %1496 = sbr.rel (%p1493) target = $region92
                $region89: #{dgm_layer_forward.1} parent=77 // loop_body
                  %v1500 = vld [vmem:[%s1498] sm:$0xff]
                  %1501 = vst [vmem:[%s1499] sm:$0xff] %v1500
                  %s1502 = sadd.s32 1, %s1497
                  %p1503 = scmp.ge.s32.totalorder %s1502, %s1485
                  %s1504 = scalar_select %p1503, 0, %s1502
                  %s1505 = smul.u32 %s1504, 8
                  %s1506 = smul.u32 %s1504, 8
                  %s1507 = scalar_lea.vmem %s1488, %s1505 [#allocation2]
                  %s1508 = scalar_lea.vmem %s1490, %s1506
                $region90: #{dgm_layer_forward.1} parent=77 // loop_footer
                  %s1494 = sadd.s32 %s1492, 1
                $region91: #{dgm_layer_forward.1} parent=77 // loop_footer_branch
                  %1491 = sbr.rel target = $region87
                $region92: #{dgm_layer_forward.1} parent=77 // loop_exit
                  _
              $region78: #{dgm_layer_forward.1} parent=55 // pred_fallthru
                _
              // Predicated region
              $region93: #{dgm_layer_forward.1} parent=55 // pred_check
                _
              $region94: #{dgm_layer_forward.1} parent=55 // pred_check_branch
                %1510 = sbr.rel target = $region96
              $region95: #{dgm_layer_forward.1} parent=55 // pred_region
                _
              $region96: #{dgm_layer_forward.1} parent=55 // pred_fallthru
                _
            $region56: #{dgm_layer_forward.1} parent=51 // pred_fallthru
              _
            // Predicated region
            $region57: #{dgm_layer_forward.1} parent=51 // pred_check
              _
            $region58: #{dgm_layer_forward.1} parent=51 // pred_check_branch
              %1367 = sbr.rel target = $region60
            $region59: #{dgm_layer_forward.1} parent=51 // pred_region
              %s1369 = sdiv.u32.pop %s1356, 13
              %s1370 = srem.u32.pop %s1356, 13
              // While loop
              $region61: #{dgm_layer_forward.1} parent=59 // loop_pre_header
                _
              $region62: #{dgm_layer_forward.1} parent=59 // loop_header
                %s1372 = sphi 0, %s1374
                %p1373 = scmp.ge.s32.totalorder %s1372, %s1369
                %s1377 = sphi 0, %s1408
                %s1378 = sphi %s1349, %s1411
                %s1379 = sphi %s1360, %s1412
              $region63: #{dgm_layer_forward.1} parent=59 // loop_header_branch
                %1376 = sbr.rel (%p1373) target = $region67
              $region64: #{dgm_layer_forward.1} parent=59 // loop_body
                %v1380 = vld [vmem:[%s1378] sm:$0xff]
                %1381 = vst [vmem:[%s1379] sm:$0xff] %v1380
                %v1382 = vld [vmem:[%s1378 + $0x8] sm:$0xff]
                %1383 = vst [vmem:[%s1379 + $0x8] sm:$0xff] %v1382
                %v1384 = vld [vmem:[%s1378 + $0x10] sm:$0xff]
                %1385 = vst [vmem:[%s1379 + $0x10] sm:$0xff] %v1384
                %v1386 = vld [vmem:[%s1378 + $0x18] sm:$0xff]
                %1387 = vst [vmem:[%s1379 + $0x18] sm:$0xff] %v1386
                %v1388 = vld [vmem:[%s1378 + $0x20] sm:$0xff]
                %1389 = vst [vmem:[%s1379 + $0x20] sm:$0xff] %v1388
                %v1390 = vld [vmem:[%s1378 + $0x28] sm:$0xff]
                %1391 = vst [vmem:[%s1379 + $0x28] sm:$0xff] %v1390
                %v1392 = vld [vmem:[%s1378 + $0x30] sm:$0xff]
                %1393 = vst [vmem:[%s1379 + $0x30] sm:$0xff] %v1392
                %v1394 = vld [vmem:[%s1378 + $0x38] sm:$0xff]
                %1395 = vst [vmem:[%s1379 + $0x38] sm:$0xff] %v1394
                %v1396 = vld [vmem:[%s1378 + $0x40] sm:$0xff]
                %1397 = vst [vmem:[%s1379 + $0x40] sm:$0xff] %v1396
                %v1398 = vld [vmem:[%s1378 + $0x48] sm:$0xff]
                %1399 = vst [vmem:[%s1379 + $0x48] sm:$0xff] %v1398
                %v1400 = vld [vmem:[%s1378 + $0x50] sm:$0xff]
                %1401 = vst [vmem:[%s1379 + $0x50] sm:$0xff] %v1400
                %v1402 = vld [vmem:[%s1378 + $0x58] sm:$0xff]
                %1403 = vst [vmem:[%s1379 + $0x58] sm:$0xff] %v1402
                %v1404 = vld [vmem:[%s1378 + $0x60] sm:$0xff]
                %1405 = vst [vmem:[%s1379 + $0x60] sm:$0xff] %v1404
                %s1406 = sadd.s32 1, %s1377
                %p1407 = scmp.ge.s32.totalorder %s1406, %s1369
                %s1408 = scalar_select %p1407, 0, %s1406
                %s1409 = smul.u32 %s1408, 104
                %s1410 = smul.u32 %s1408, 104
                %s1411 = scalar_lea.vmem %s1349, %s1409 [#allocation2]
                %s1412 = scalar_lea.vmem %s1360, %s1410
              $region65: #{dgm_layer_forward.1} parent=59 // loop_footer
                %s1374 = sadd.s32 %s1372, 1
              $region66: #{dgm_layer_forward.1} parent=59 // loop_footer_branch
                %1371 = sbr.rel target = $region62
              $region67: #{dgm_layer_forward.1} parent=59 // loop_exit
                _
              %s1413 = sdiv.u32.pop %s1356, 13
              %s1414 = srem.u32.pop %s1356, 13
              %s1415 = smul.u32 %s1413, 13
              %s1416 = smul.u32 8, %s1415
              %s1417 = scalar_lea.vmem %s1349, %s1416 [#allocation2]
              %s1418 = smul.u32 8, %s1415
              %s1419 = scalar_lea.vmem %s1360, %s1418
              // While loop
              $region68: #{dgm_layer_forward.1} parent=59 // loop_pre_header
                _
              $region69: #{dgm_layer_forward.1} parent=59 // loop_header
                %s1421 = sphi 0, %s1423
                %p1422 = scmp.ge.s32.totalorder %s1421, %s1414
                %s1426 = sphi 0, %s1433
                %s1427 = sphi %s1417, %s1436
                %s1428 = sphi %s1419, %s1437
              $region70: #{dgm_layer_forward.1} parent=59 // loop_header_branch
                %1425 = sbr.rel (%p1422) target = $region74
              $region71: #{dgm_layer_forward.1} parent=59 // loop_body
                %v1429 = vld [vmem:[%s1427] sm:$0xff]
                %1430 = vst [vmem:[%s1428] sm:$0xff] %v1429
                %s1431 = sadd.s32 1, %s1426
                %p1432 = scmp.ge.s32.totalorder %s1431, %s1414
                %s1433 = scalar_select %p1432, 0, %s1431
                %s1434 = smul.u32 %s1433, 8
                %s1435 = smul.u32 %s1433, 8
                %s1436 = scalar_lea.vmem %s1417, %s1434 [#allocation2]
                %s1437 = scalar_lea.vmem %s1419, %s1435
              $region72: #{dgm_layer_forward.1} parent=59 // loop_footer
                %s1423 = sadd.s32 %s1421, 1
              $region73: #{dgm_layer_forward.1} parent=59 // loop_footer_branch
                %1420 = sbr.rel target = $region69
              $region74: #{dgm_layer_forward.1} parent=59 // loop_exit
                _
            $region60: #{dgm_layer_forward.1} parent=51 // pred_fallthru
              _
          $region52: #{dgm_layer_forward.1} parent=47 // pred_fallthru
            _
          %1511 = vnop
        $region48: #{dgm_layer_forward.1} parent=43 // pred_fallthru
          _
      $region44: #{dgm_layer_forward.1} parent=5 // pred_fallthru
        _
      %p1512 = scmp.le.s32.totalorder 2, %s12
      // Predicated region
      $region97: #{dgm_layer_forward.1} parent=5 // pred_check
        %p1513 = pneg %p1512
      $region98: #{dgm_layer_forward.1} parent=5 // pred_check_branch
        %1515 = sbr.rel (%p1513) target = $region100
      $region99: #{dgm_layer_forward.1} parent=5 // pred_region
        %s1516 = ssub.s32 %s12, 2
        // Predicated region
        $region101: #{dgm_layer_forward.1} parent=99 // pred_check
          %p1517 = pneg %p177
        $region102: #{dgm_layer_forward.1} parent=99 // pred_check_branch
          %1519 = sbr.rel (%p1517) target = $region104
        $region103: #{dgm_layer_forward.1} parent=99 // pred_region
          %s1520 = sand.u32 %s162, 1
          %s1521 = sand.u32 %s162, 1
          %s1522 = smul.addr %s1521, 104
          %s1523 = scalar_lea.vmem [#allocation2], %s1522
        $region104: #{dgm_layer_forward.1} parent=99 // pred_fallthru
          _
      $region100: #{dgm_layer_forward.1} parent=5 // pred_fallthru
        _
    $region6: #{dgm_layer_forward.1} parent=1 // loop_footer
      %s16 = sadd.s32 1, %s12
    $region7: #{dgm_layer_forward.1} parent=1 // loop_footer_branch
      %11 = sbr.rel target = $region3
    $region8: #{dgm_layer_forward.1} parent=1 // loop_exit
      _

</llo_original>
